<compile_context>
chip_gen: v7x
topology: tpu7x:2x2x1
jax: 0.10.0
libtpu: 0.0.40
codegen_flags: <defaults>
</compile_context>

<pallas_src>
import functools
import math

import jax
import jax.numpy as jnp
from jax.experimental import pallas as pl
from jax.experimental.pallas import tpu as pltpu


def _round_up(x, m):
    return ((x + m - 1) // m) * m


def _sublane_pack(dtype):
    """Sublane packing factor: 8 for f32, 16 for bf16, 32 for int8/fp8."""
    return max(8, 32 // max(1, jnp.dtype(dtype).itemsize))


def _vmem_limit_bytes():
    """~75% of physical VMEM (96 MiB on v5e/v6e, 48 MiB on v7x); None → default."""
    try:
        return int(pltpu.get_tpu_info().vmem_capacity_bytes * 3 // 4)
    except Exception:
        return None


@functools.cache
def _resident_pipeline_mode():
    """pl.Buffered(1) for weight-resident blocks: a constant index_map never
    re-DMAs, so a single buffer suffices and halves resident VMEM.  Probe once
    with a tiny kernel; fall back to the default double-buffering if this
    jax/Mosaic build rejects pipeline_mode here."""
    try:
        mode = pl.Buffered(1)

        def _probe_kernel(w_ref, o_ref):
            o_ref[...] = w_ref[...]

        out = pl.pallas_call(
            _probe_kernel,
            grid=(2, 2),
            in_specs=[pl.BlockSpec((8, 128), lambda i, t: (0, 0),
                                   pipeline_mode=mode)],
            out_specs=pl.BlockSpec((8, 128), lambda i, t: (i, t)),
            out_shape=jax.ShapeDtypeStruct((16, 256), jnp.float32),
        )(jnp.ones((8, 128), jnp.float32))
        jax.block_until_ready(out)
        if not bool(jnp.all(out == 1.0)):
            return None
        return mode
    except Exception:
        return None


def _resident_spec(shape, mode):
    """BlockSpec for a value that stays resident in VMEM across the grid."""
    index_map = lambda *_: (0,) * len(shape)
    if mode is not None:
        return pl.BlockSpec(shape, index_map, pipeline_mode=mode)
    return pl.BlockSpec(shape, index_map)


def _layernorm(x, gamma, beta, eps=1e-5):
    # Matches torch.nn.LayerNorm (biased variance, eps=1e-5).
    # var = E[x^2] - mu^2: the two XLU lane reductions are independent and
    # overlap, instead of serializing mu -> (x-mu) -> reduce.
    mu = jnp.mean(x, axis=-1, keepdims=True)
    ms = jnp.mean(x * x, axis=-1, keepdims=True)
    var = jnp.maximum(ms - mu * mu, 0.0)
    return (x - mu) * jax.lax.rsqrt(var + eps) * gamma + beta


def lnlstm_seq_kernel(x_ref, h0_ref, c0_ref,
                      wih_t_ref, whh_t_ref,
                      gi_w_ref, gi_b_ref,
                      gh_w_ref, gh_b_ref,
                      gc_w_ref, gc_b_ref,
                      hc_ref, h_sc, c_sc, *, gate_dtype):
    H = c0_ref.shape[-1]
    t = pl.program_id(1)

    # Initialize the f32 recurrent carry at the first time step of each
    # batch block (time is the inner, "arbitrary" grid axis).
    @pl.when(t == 0)
    def _():
        h_sc[...] = h0_ref[...].astype(jnp.float32)
        c_sc[...] = c0_ref[...].astype(jnp.float32)

    # MXU matmuls at the weights' dtype (bf16 on the fast path), f32 accum.
    w_dtype = wih_t_ref.dtype
    igates_raw = jnp.dot(x_ref[...].astype(w_dtype), wih_t_ref[...],
                         preferred_element_type=jnp.float32)
    hgates_raw = jnp.dot(h_sc[...].astype(w_dtype), whh_t_ref[...],
                         preferred_element_type=jnp.float32)

    # LayerNorm statistics in f32 on the matmul results.
    igates = _layernorm(igates_raw, gi_w_ref[...], gi_b_ref[...])
    hgates = _layernorm(hgates_raw, gh_w_ref[...], gh_b_ref[...])
    gates = (igates + hgates).astype(gate_dtype)

    # Gate layout is [i, f, o, c] (permuted host-side): one contiguous stream
    # over 3H lanes for the sigmoids + one tanh over the last H lanes.
    # sigmoid(z) == 0.5*(tanh(0.5*z)+1): a single EUP tanh per element instead
    # of exp + reciprocal (EUP is the binding slot at small K).
    sig = 0.5 * (jnp.tanh(0.5 * gates[:, :3 * H]) + 1.0)
    ingate = sig[:, 0:H]
    forgetgate = sig[:, H:2 * H]
    outgate = sig[:, 2 * H:3 * H]
    cellgate = jnp.tanh(gates[:, 3 * H:])

    # Cell update + its LayerNorm stay in f32 (carry precision).
    c_new = (forgetgate.astype(jnp.float32) * c_sc[...]
             + (ingate * cellgate).astype(jnp.float32))
    cy = _layernorm(c_new, gc_w_ref[...], gc_b_ref[...])
    hy = outgate.astype(jnp.float32) * jnp.tanh(cy)

    h_sc[...] = hy
    c_sc[...] = cy
    # Single lane-dense (TB, 2H) store per step instead of two H-wide ones.
    hc_ref[...] = jnp.concatenate([hy, cy], axis=-1).astype(hc_ref.dtype)


def prepare_params(params, compute_dtype=None):
    """One-time host-side prep (do NOT call per step):
      * transpose weights to (K, 4H) and optionally cast to `compute_dtype`
        (bf16 recommended on v6e/v7x: ~2-3x MXU throughput, half the resident
        weight VMEM; keep f32 if you need <=1e-4 agreement with torch),
      * permute the 4H gate axis from torch's [i,f,c,o] to [i,f,o,c],
      * keep LayerNorm gammas/betas in f32 (tiny; LN math runs in f32)."""
    H4 = params["weight_ih"].shape[0]
    H = H4 // 4
    w_dtype = compute_dtype if compute_dtype is not None else params["weight_ih"].dtype

    def permute_cols(w_t):               # (K, 4H), cols in torch order i,f,c,o
        i, f, c, o = jnp.split(w_t, 4, axis=-1)
        return jnp.concatenate([i, f, o, c], axis=-1).astype(w_dtype)

    def permute_vec(v):                  # (4H,)
        i, f, c, o = jnp.split(v, 4)
        return jnp.concatenate([i, f, o, c]).reshape(1, H4).astype(jnp.float32)

    return {
        "wih_t": permute_cols(params["weight_ih"].T),   # (In, 4H)
        "whh_t": permute_cols(params["weight_hh"].T),   # (H, 4H)
        "gi_w": permute_vec(params["ln_i_w"]),
        "gi_b": permute_vec(params["ln_i_b"]),
        "gh_w": permute_vec(params["ln_h_w"]),
        "gh_b": permute_vec(params["ln_h_b"]),
        "gc_w": params["ln_c_w"].reshape(1, H).astype(jnp.float32),
        "gc_b": params["ln_c_b"].reshape(1, H).astype(jnp.float32),
    }


def layernorm_lstm_seq(x_seq, h0, c0, prepared, *, block_b=256,
                       batch_semantics="parallel"):
    """Fused LayerNorm-LSTM over a whole sequence.

    x_seq: (T, B, In); h0, c0: (B, H).  Returns (hy_seq, cy_seq), each
    (T, B, H).  Weights are loaded into VMEM once per (batch block, sequence);
    the h/c recurrence is carried in f32 VMEM scratch across time steps."""
    T, B, In = x_seq.shape
    H = h0.shape[-1]
    H4 = 4 * H
    assert H % 128 == 0, "hidden_size must be a multiple of 128 (lane-dense gate slices/stores)"

    state_dtype = h0.dtype
    w_dtype = prepared["wih_t"].dtype
    pack = max(_sublane_pack(x_seq.dtype), _sublane_pack(state_dtype),
               _sublane_pack(w_dtype))

    # Balanced batch blocks, rounded to the sublane pack; one block when B fits.
    tb_cap = max(pack, min(block_b, _round_up(B, pack)))
    num_b = pl.cdiv(B, tb_cap)
    TB = _round_up(pl.cdiv(B, num_b), pack)
    B_pad = num_b * TB
    if B_pad != B:
        x_seq = jnp.pad(x_seq, ((0, 0), (0, B_pad - B), (0, 0)))
        h0 = jnp.pad(h0, ((0, B_pad - B), (0, 0)))
        c0 = jnp.pad(c0, ((0, B_pad - B), (0, 0)))

    mode = _resident_pipeline_mode()
    res = lambda shape: _resident_spec(shape, mode)

    # Gate nonlinearity / elementwise math follows the weight dtype: bf16 on
    # the v6e/v7x fast path, f32 otherwise (v5e has no bf16 VPU/EUP anyway).
    gate_dtype = jnp.bfloat16 if w_dtype == jnp.bfloat16 else jnp.float32
    kernel = functools.partial(lnlstm_seq_kernel, gate_dtype=gate_dtype)

    hc = pl.pallas_call(
        kernel,
        grid=(num_b, T),                      # time innermost ("arbitrary")
        out_shape=jax.ShapeDtypeStruct((T, B_pad, 2 * H), state_dtype),
        in_specs=[
            pl.BlockSpec((None, TB, In), lambda i, t: (t, i, 0)),   # x_t
            pl.BlockSpec((TB, H), lambda i, t: (i, 0)),             # h0
            pl.BlockSpec((TB, H), lambda i, t: (i, 0)),             # c0
            res((In, H4)), res((H, H4)),                            # weights
            res((1, H4)), res((1, H4)),
            res((1, H4)), res((1, H4)),
            res((1, H)), res((1, H)),
        ],
        out_specs=pl.BlockSpec((None, TB, 2 * H), lambda i, t: (t, i, 0)),
        scratch_shapes=[pltpu.VMEM((TB, H), jnp.float32),           # h carry
                        pltpu.VMEM((TB, H), jnp.float32)],          # c carry
        compiler_params=pltpu.CompilerParams(
            dimension_semantics=(batch_semantics, "arbitrary"),
            vmem_limit_bytes=_vmem_limit_bytes()),
    )(x_seq, h0, c0, prepared["wih_t"], prepared["whh_t"],
      prepared["gi_w"], prepared["gi_b"],
      prepared["gh_w"], prepared["gh_b"],
      prepared["gc_w"], prepared["gc_b"])

    hy_seq = hc[:, :B, :H]
    cy_seq = hc[:, :B, H:]
    return hy_seq, cy_seq


def layernorm_lstm_cell(x, hx, cx, prepared, *, block_b=256,
                        batch_semantics="parallel"):
    """One LayerNormLSTMCell step (the PyTorch module's forward).
    For sequences use layernorm_lstm_seq so weights are DMA'd once per
    sequence instead of once per step.  Returns (hy, cy)."""
    hy_seq, cy_seq = layernorm_lstm_seq(x[None], hx, cx, prepared,
                                        block_b=block_b,
                                        batch_semantics=batch_semantics)
    return hy_seq[0], cy_seq[0]


def init_params(key, input_size, hidden_size, dtype=jnp.float32):
    """Deterministic init matching the PyTorch module's __init__."""
    stdv = 1.0 / math.sqrt(hidden_size)
    k1, k2 = jax.random.split(key)
    return {
        "weight_ih": jax.random.uniform(k1, (4 * hidden_size, input_size),
                                        dtype, -stdv, stdv),
        "weight_hh": jax.random.uniform(k2, (4 * hidden_size, hidden_size),
                                        dtype, -stdv, stdv),
        # nn.LayerNorm defaults: weight=1, bias=0
        "ln_i_w": jnp.ones((4 * hidden_size,), dtype),
        "ln_i_b": jnp.zeros((4 * hidden_size,), dtype),
        "ln_h_w": jnp.ones((4 * hidden_size,), dtype),
        "ln_h_b": jnp.zeros((4 * hidden_size,), dtype),
        "ln_c_w": jnp.ones((hidden_size,), dtype),
        "ln_c_b": jnp.zeros((hidden_size,), dtype),
    }


def reference(x, hx, cx, params):
    """Plain-JAX reference mirroring the PyTorch forward (torch gate order)."""
    def ln(v, w, b, eps=1e-5):
        mu = jnp.mean(v, -1, keepdims=True)
        var = jnp.mean((v - mu) ** 2, -1, keepdims=True)
        return (v - mu) / jnp.sqrt(var + eps) * w + b

    H = hx.shape[1]
    igates = ln(x @ params["weight_ih"].T, params["ln_i_w"], params["ln_i_b"])
    hgates = ln(hx @ params["weight_hh"].T, params["ln_h_w"], params["ln_h_b"])
    g = igates + hgates
    i, f, c, o = (g[:, :H], g[:, H:2 * H], g[:, 2 * H:3 * H], g[:, 3 * H:])
    i, f, c, o = jax.nn.sigmoid(i), jax.nn.sigmoid(f), jnp.tanh(c), jax.nn.sigmoid(o)
    cy = ln(f * cx + i * c, params["ln_c_w"], params["ln_c_b"])
    hy = o * jnp.tanh(cy)
    return hy, cy


def reference_seq(x_seq, h0, c0, params):
    def step(carry, x):
        h, c = reference(x, carry[0], carry[1], params)
        return (h, c), (h, c)
    _, (hs, cs) = jax.lax.scan(step, (h0, c0), x_seq)
    return hs, cs


if __name__ == "__main__":
    key = jax.random.PRNGKey(0)
    kx, kh, kc, kp = jax.random.split(key, 4)

    # Small but lane-aligned shapes (H multiple of 128 -> unmasked stores,
    # lane-aligned gate slices). T=8 exercises the fused time loop; block_b=16
    # exercises a 2-block batch grid for the single-step path.
    B, T, input_size, hidden_size = 32, 8, 128, 128
    x_seq = jax.random.normal(kx, (T, B, input_size), jnp.float32)
    hx = jax.random.normal(kh, (B, hidden_size), jnp.float32)
    cx = jax.random.normal(kc, (B, hidden_size), jnp.float32)
    params = init_params(kp, input_size, hidden_size)

    # ---- f32 path: single step (the module's forward), tight tolerance ----
    prepared_f32 = prepare_params(params)                 # one-time prep
    hy, cy = layernorm_lstm_cell(x_seq[0], hx, cx, prepared_f32, block_b=16)
    jax.block_until_ready((hy, cy))
    hy_ref, cy_ref = reference(x_seq[0], hx, cx, params)
    assert jnp.allclose(hy, hy_ref, atol=1e-4, rtol=1e-4)
    assert jnp.allclose(cy, cy_ref, atol=1e-4, rtol=1e-4)

    # ---- f32 path: fused sequence vs scanned reference ----
    hy_s, cy_s = layernorm_lstm_seq(x_seq, hx, cx, prepared_f32)
    jax.block_until_ready((hy_s, cy_s))
    hy_rs, cy_rs = reference_seq(x_seq, hx, cx, params)
    assert jnp.allclose(hy_s, hy_rs, atol=3e-4, rtol=3e-4)
    assert jnp.allclose(cy_s, cy_rs, atol=3e-4, rtol=3e-4)

    # ---- bf16-weight fast path (v6e/v7x), relaxed tolerance ----
    prepared_bf16 = prepare_params(params, compute_dtype=jnp.bfloat16)
    hy_b, cy_b = layernorm_lstm_seq(x_seq, hx, cx, prepared_bf16)
    jax.block_until_ready((hy_b, cy_b))
    assert jnp.allclose(hy_b, hy_rs, atol=8e-2, rtol=8e-2)
    assert jnp.allclose(cy_b, cy_rs, atol=8e-2, rtol=8e-2)

    print("KERNEL_OK")
</pallas_src>

<mosaic_0001>
module attributes {stable_mosaic.version = 11 : i64} {
  func.func @_probe_kernel(%arg0: i32, %arg1: i32, %arg2: memref<8x128xf32, #tpu.memory_space<vmem>>, %arg3: memref<8x128xf32, #tpu.memory_space<vmem>>) attributes {dimension_semantics = [#tpu.dimension_semantics<arbitrary>, #tpu.dimension_semantics<arbitrary>], iteration_bounds = array<i64: 2, 2>, scalar_prefetch = 0 : i64, scratch_operands = 0 : i64, tpu.core_type = #tpu.core_type<tc>, window_params = [{pipeline_mode = #tpu.pipeline_mode<synchronous>, transform_indices = @transform_0, window_bounds = array<i64: 8, 128>}, {transform_indices = @transform_1, window_bounds = array<i64: 8, 128>}]} {
    %c0 = arith.constant 0 : index
    %c0_0 = arith.constant 0 : index
    %0 = vector.load %arg2[%c0, %c0_0] : memref<8x128xf32, #tpu.memory_space<vmem>>, vector<8x128xf32>
    %c0_1 = arith.constant 0 : index
    %c0_2 = arith.constant 0 : index
    %1 = vector.load %arg3[%c0_1, %c0_2] : memref<8x128xf32, #tpu.memory_space<vmem>>, vector<8x128xf32>
    tpu.vector_store %arg3[%c0_1, %c0_2], %0 {strides = array<i32>} : memref<8x128xf32, #tpu.memory_space<vmem>>, vector<8x128xf32>,
    return
  }
  func.func @transform_0(%arg0: i32, %arg1: i32) -> (i32, i32) {
    %c0_i32 = arith.constant 0 : i32
    %c0_i32_0 = arith.constant 0 : i32
    %c0_i32_1 = arith.constant 0 : i32
    return %c0_i32, %c0_i32_0 : i32, i32
  }
  func.func @transform_1(%arg0: i32, %arg1: i32) -> (i32, i32) {
    %c0_i32 = arith.constant 0 : i32
    return %arg0, %arg1 : i32, i32
  }
}

module attributes {stable_mosaic.version = 11 : i64} {
  func.func @lnlstm_seq_kernel(%arg0: i32, %arg1: i32, %arg2: memref<1x16x128xf32, #tpu.memory_space<vmem>>, %arg3: memref<16x128xf32, #tpu.memory_space<vmem>>, %arg4: memref<16x128xf32, #tpu.memory_space<vmem>>, %arg5: memref<128x512xf32, #tpu.memory_space<vmem>>, %arg6: memref<128x512xf32, #tpu.memory_space<vmem>>, %arg7: memref<1x512xf32, #tpu.memory_space<vmem>>, %arg8: memref<1x512xf32, #tpu.memory_space<vmem>>, %arg9: memref<1x512xf32, #tpu.memory_space<vmem>>, %arg10: memref<1x512xf32, #tpu.memory_space<vmem>>, %arg11: memref<1x128xf32, #tpu.memory_space<vmem>>, %arg12: memref<1x128xf32, #tpu.memory_space<vmem>>, %arg13: memref<1x16x256xf32, #tpu.memory_space<vmem>>, %arg14: memref<16x128xf32, #tpu.memory_space<vmem>>, %arg15: memref<16x128xf32, #tpu.memory_space<vmem>>) attributes {dimension_semantics = [#tpu.dimension_semantics<parallel>, #tpu.dimension_semantics<arbitrary>], iteration_bounds = array<i64: 2, 1>, scalar_prefetch = 0 : i64, scratch_operands = 2 : i64, tpu.core_type = #tpu.core_type<tc>, window_params = [{transform_indices = @transform_0, window_bounds = array<i64: 1, 16, 128>}, {transform_indices = @transform_1, window_bounds = array<i64: 16, 128>}, {transform_indices = @transform_2, window_bounds = array<i64: 16, 128>}, {pipeline_mode = #tpu.pipeline_mode<synchronous>, transform_indices = @transform_3, window_bounds = array<i64: 128, 512>}, {pipeline_mode = #tpu.pipeline_mode<synchronous>, transform_indices = @transform_4, window_bounds = array<i64: 128, 512>}, {pipeline_mode = #tpu.pipeline_mode<synchronous>, transform_indices = @transform_5, window_bounds = array<i64: 1, 512>}, {pipeline_mode = #tpu.pipeline_mode<synchronous>, transform_indices = @transform_6, window_bounds = array<i64: 1, 512>}, {pipeline_mode = #tpu.pipeline_mode<synchronous>, transform_indices = @transform_7, window_bounds = array<i64: 1, 512>}, {pipeline_mode = #tpu.pipeline_mode<synchronous>, transform_indices = @transform_8, window_bounds = array<i64: 1, 512>}, {pipeline_mode = #tpu.pipeline_mode<synchronous>, transform_indices = @transform_9, window_bounds = array<i64: 1, 128>}, {pipeline_mode = #tpu.pipeline_mode<synchronous>, transform_indices = @transform_10, window_bounds = array<i64: 1, 128>}, {transform_indices = @transform_11, window_bounds = array<i64: 1, 16, 256>}]} {
    %c0_i32 = arith.constant 0 : i32
    %0 = arith.cmpi eq, %arg1, %c0_i32 : i32
    %1 = arith.extui %0 : i1 to i32
    %c0_i32_0 = arith.constant 0 : i32
    %2 = arith.cmpi ne, %1, %c0_i32_0 : i32
    scf.if %2 {
      %c0_52 = arith.constant 0 : index
      %c0_53 = arith.constant 0 : index
      %114 = vector.load %arg3[%c0_52, %c0_53] : memref<16x128xf32, #tpu.memory_space<vmem>>, vector<16x128xf32>
      %c0_54 = arith.constant 0 : index
      %c0_55 = arith.constant 0 : index
      %115 = vector.load %arg14[%c0_54, %c0_55] : memref<16x128xf32, #tpu.memory_space<vmem>>, vector<16x128xf32>
      tpu.vector_store %arg14[%c0_54, %c0_55], %114 {strides = array<i32>} : memref<16x128xf32, #tpu.memory_space<vmem>>, vector<16x128xf32>,
      %c0_56 = arith.constant 0 : index
      %c0_57 = arith.constant 0 : index
      %116 = vector.load %arg4[%c0_56, %c0_57] : memref<16x128xf32, #tpu.memory_space<vmem>>, vector<16x128xf32>
      %c0_58 = arith.constant 0 : index
      %c0_59 = arith.constant 0 : index
      %117 = vector.load %arg15[%c0_58, %c0_59] : memref<16x128xf32, #tpu.memory_space<vmem>>, vector<16x128xf32>
      tpu.vector_store %arg15[%c0_58, %c0_59], %116 {strides = array<i32>} : memref<16x128xf32, #tpu.memory_space<vmem>>, vector<16x128xf32>,
    } else {
    }
    %c0 = arith.constant 0 : index
    %c0_1 = arith.constant 0 : index
    %c0_2 = arith.constant 0 : index
    %3 = vector.load %arg2[%c0, %c0_1, %c0_2] : memref<1x16x128xf32, #tpu.memory_space<vmem>>, vector<1x16x128xf32>
    %4 = vector.shape_cast %3 : vector<1x16x128xf32> to vector<16x128xf32>
    %c0_3 = arith.constant 0 : index
    %c0_4 = arith.constant 0 : index
    %5 = vector.load %arg5[%c0_3, %c0_4] : memref<128x512xf32, #tpu.memory_space<vmem>>, vector<128x512xf32>
    %cst = arith.constant dense<0.000000e+00> : vector<16x512xf32>
    %6 = tpu.matmul %4, %5, %cst {dimension_numbers = #tpu.dot_dimension_numbers<[1], [0], [0], [1], [0, 0, 1, 1], [], []>} : vector<16x128xf32>, vector<128x512xf32>, vector<16x512xf32> -> vector<16x512xf32>
    %c0_5 = arith.constant 0 : index
    %c0_6 = arith.constant 0 : index
    %7 = vector.load %arg14[%c0_5, %c0_6] : memref<16x128xf32, #tpu.memory_space<vmem>>, vector<16x128xf32>
    %c0_7 = arith.constant 0 : index
    %c0_8 = arith.constant 0 : index
    %8 = vector.load %arg6[%c0_7, %c0_8] : memref<128x512xf32, #tpu.memory_space<vmem>>, vector<128x512xf32>
    %cst_9 = arith.constant dense<0.000000e+00> : vector<16x512xf32>
    %9 = tpu.matmul %7, %8, %cst_9 {dimension_numbers = #tpu.dot_dimension_numbers<[1], [0], [0], [1], [0, 0, 1, 1], [], []>} : vector<16x128xf32>, vector<128x512xf32>, vector<16x512xf32> -> vector<16x512xf32>
    %c0_10 = arith.constant 0 : index
    %c0_11 = arith.constant 0 : index
    %10 = vector.load %arg7[%c0_10, %c0_11] : memref<1x512xf32, #tpu.memory_space<vmem>>, vector<1x512xf32>
    %c0_12 = arith.constant 0 : index
    %c0_13 = arith.constant 0 : index
    %11 = vector.load %arg8[%c0_12, %c0_13] : memref<1x512xf32, #tpu.memory_space<vmem>>, vector<1x512xf32>
    %cst_14 = arith.constant dense<0.000000e+00> : vector<16xf32>
    %12 = vector.multi_reduction <add>, %6, %cst_14 [1] : vector<16x512xf32> to vector<16xf32>
    %13 = vector.shape_cast %12 : vector<16xf32> to vector<16x1xf32>
    %cst_15 = arith.constant 5.120000e+02 : f32
    %14 = vector.broadcast %cst_15 : f32 to vector<16x1xf32>
    %15 = arith.divf %13, %14 : vector<16x1xf32>
    %16 = arith.mulf %6, %6 : vector<16x512xf32>
    %cst_16 = arith.constant dense<0.000000e+00> : vector<16xf32>
    %17 = vector.multi_reduction <add>, %16, %cst_16 [1] : vector<16x512xf32> to vector<16xf32>
    %18 = vector.shape_cast %17 : vector<16xf32> to vector<16x1xf32>
    %cst_17 = arith.constant 5.120000e+02 : f32
    %19 = vector.broadcast %cst_17 : f32 to vector<16x1xf32>
    %20 = arith.divf %18, %19 : vector<16x1xf32>
    %21 = arith.mulf %15, %15 : vector<16x1xf32>
    %22 = arith.subf %20, %21 : vector<16x1xf32>
    %cst_18 = arith.constant 0.000000e+00 : f32
    %23 = vector.broadcast %cst_18 : f32 to vector<16x1xf32>
    %24 = arith.maximumf %22, %23 : vector<16x1xf32>
    %25 = vector.broadcast %15 : vector<16x1xf32> to vector<16x512xf32>
    %26 = arith.subf %6, %25 : vector<16x512xf32>
    %cst_19 = arith.constant 9.99999974E-6 : f32
    %27 = vector.broadcast %cst_19 : f32 to vector<16x1xf32>
    %28 = arith.addf %24, %27 : vector<16x1xf32>
    %29 = math.rsqrt %28 : vector<16x1xf32>
    %30 = vector.broadcast %29 : vector<16x1xf32> to vector<16x512xf32>
    %31 = arith.mulf %26, %30 : vector<16x512xf32>
    %32 = vector.broadcast %10 : vector<1x512xf32> to vector<16x512xf32>
    %33 = arith.mulf %31, %32 : vector<16x512xf32>
    %34 = vector.broadcast %11 : vector<1x512xf32> to vector<16x512xf32>
    %35 = arith.addf %33, %34 : vector<16x512xf32>
    %c0_20 = arith.constant 0 : index
    %c0_21 = arith.constant 0 : index
    %36 = vector.load %arg9[%c0_20, %c0_21] : memref<1x512xf32, #tpu.memory_space<vmem>>, vector<1x512xf32>
    %c0_22 = arith.constant 0 : index
    %c0_23 = arith.constant 0 : index
    %37 = vector.load %arg10[%c0_22, %c0_23] : memref<1x512xf32, #tpu.memory_space<vmem>>, vector<1x512xf32>
    %cst_24 = arith.constant dense<0.000000e+00> : vector<16xf32>
    %38 = vector.multi_reduction <add>, %9, %cst_24 [1] : vector<16x512xf32> to vector<16xf32>
    %39 = vector.shape_cast %38 : vector<16xf32> to vector<16x1xf32>
    %cst_25 = arith.constant 5.120000e+02 : f32
    %40 = vector.broadcast %cst_25 : f32 to vector<16x1xf32>
    %41 = arith.divf %39, %40 : vector<16x1xf32>
    %42 = arith.mulf %9, %9 : vector<16x512xf32>
    %cst_26 = arith.constant dense<0.000000e+00> : vector<16xf32>
    %43 = vector.multi_reduction <add>, %42, %cst_26 [1] : vector<16x512xf32> to vector<16xf32>
    %44 = vector.shape_cast %43 : vector<16xf32> to vector<16x1xf32>
    %cst_27 = arith.constant 5.120000e+02 : f32
    %45 = vector.broadcast %cst_27 : f32 to vector<16x1xf32>
    %46 = arith.divf %44, %45 : vector<16x1xf32>
    %47 = arith.mulf %41, %41 : vector<16x1xf32>
    %48 = arith.subf %46, %47 : vector<16x1xf32>
    %cst_28 = arith.constant 0.000000e+00 : f32
    %49 = vector.broadcast %cst_28 : f32 to vector<16x1xf32>
    %50 = arith.maximumf %48, %49 : vector<16x1xf32>
    %51 = vector.broadcast %41 : vector<16x1xf32> to vector<16x512xf32>
    %52 = arith.subf %9, %51 : vector<16x512xf32>
    %cst_29 = arith.constant 9.99999974E-6 : f32
    %53 = vector.broadcast %cst_29 : f32 to vector<16x1xf32>
    %54 = arith.addf %50, %53 : vector<16x1xf32>
    %55 = math.rsqrt %54 : vector<16x1xf32>
    %56 = vector.broadcast %55 : vector<16x1xf32> to vector<16x512xf32>
    %57 = arith.mulf %52, %56 : vector<16x512xf32>
    %58 = vector.broadcast %36 : vector<1x512xf32> to vector<16x512xf32>
    %59 = arith.mulf %57, %58 : vector<16x512xf32>
    %60 = vector.broadcast %37 : vector<1x512xf32> to vector<16x512xf32>
    %61 = arith.addf %59, %60 : vector<16x512xf32>
    %62 = arith.addf %35, %61 : vector<16x512xf32>
    %63 = vector.extract_strided_slice %62 {offsets = [0, 0], sizes = [16, 384], strides = [1, 1]} : vector<16x512xf32> to vector<16x384xf32>
    %cst_30 = arith.constant 5.000000e-01 : f32
    %64 = vector.broadcast %cst_30 : f32 to vector<16x384xf32>
    %65 = arith.mulf %64, %63 : vector<16x384xf32>
    %66 = math.tanh %65 : vector<16x384xf32>
    %cst_31 = arith.constant 1.000000e+00 : f32
    %67 = vector.broadcast %cst_31 : f32 to vector<16x384xf32>
    %68 = arith.addf %66, %67 : vector<16x384xf32>
    %cst_32 = arith.constant 5.000000e-01 : f32
    %69 = vector.broadcast %cst_32 : f32 to vector<16x384xf32>
    %70 = arith.mulf %69, %68 : vector<16x384xf32>
    %71 = vector.extract_strided_slice %70 {offsets = [0, 0], sizes = [16, 128], strides = [1, 1]} : vector<16x384xf32> to vector<16x128xf32>
    %72 = vector.extract_strided_slice %70 {offsets = [0, 128], sizes = [16, 128], strides = [1, 1]} : vector<16x384xf32> to vector<16x128xf32>
    %73 = vector.extract_strided_slice %70 {offsets = [0, 256], sizes = [16, 128], strides = [1, 1]} : vector<16x384xf32> to vector<16x128xf32>
    %74 = vector.extract_strided_slice %62 {offsets = [0, 384], sizes = [16, 128], strides = [1, 1]} : vector<16x512xf32> to vector<16x128xf32>
    %75 = math.tanh %74 : vector<16x128xf32>
    %c0_33 = arith.constant 0 : index
    %c0_34 = arith.constant 0 : index
    %76 = vector.load %arg15[%c0_33, %c0_34] : memref<16x128xf32, #tpu.memory_space<vmem>>, vector<16x128xf32>
    %77 = arith.mulf %72, %76 : vector<16x128xf32>
    %78 = arith.mulf %71, %75 : vector<16x128xf32>
    %79 = arith.addf %77, %78 : vector<16x128xf32>
    %c0_35 = arith.constant 0 : index
    %c0_36 = arith.constant 0 : index
    %80 = vector.load %arg11[%c0_35, %c0_36] : memref<1x128xf32, #tpu.memory_space<vmem>>, vector<1x128xf32>
    %c0_37 = arith.constant 0 : index
    %c0_38 = arith.constant 0 : index
    %81 = vector.load %arg12[%c0_37, %c0_38] : memref<1x128xf32, #tpu.memory_space<vmem>>, vector<1x128xf32>
    %cst_39 = arith.constant dense<0.000000e+00> : vector<16xf32>
    %82 = vector.multi_reduction <add>, %79, %cst_39 [1] : vector<16x128xf32> to vector<16xf32>
    %83 = vector.shape_cast %82 : vector<16xf32> to vector<16x1xf32>
    %cst_40 = arith.constant 1.280000e+02 : f32
    %84 = vector.broadcast %cst_40 : f32 to vector<16x1xf32>
    %85 = arith.divf %83, %84 : vector<16x1xf32>
    %86 = arith.mulf %79, %79 : vector<16x128xf32>
    %cst_41 = arith.constant dense<0.000000e+00> : vector<16xf32>
    %87 = vector.multi_reduction <add>, %86, %cst_41 [1] : vector<16x128xf32> to vector<16xf32>
    %88 = vector.shape_cast %87 : vector<16xf32> to vector<16x1xf32>
    %cst_42 = arith.constant 1.280000e+02 : f32
    %89 = vector.broadcast %cst_42 : f32 to vector<16x1xf32>
    %90 = arith.divf %88, %89 : vector<16x1xf32>
    %91 = arith.mulf %85, %85 : vector<16x1xf32>
    %92 = arith.subf %90, %91 : vector<16x1xf32>
    %cst_43 = arith.constant 0.000000e+00 : f32
    %93 = vector.broadcast %cst_43 : f32 to vector<16x1xf32>
    %94 = arith.maximumf %92, %93 : vector<16x1xf32>
    %95 = vector.broadcast %85 : vector<16x1xf32> to vector<16x128xf32>
    %96 = arith.subf %79, %95 : vector<16x128xf32>
    %cst_44 = arith.constant 9.99999974E-6 : f32
    %97 = vector.broadcast %cst_44 : f32 to vector<16x1xf32>
    %98 = arith.addf %94, %97 : vector<16x1xf32>
    %99 = math.rsqrt %98 : vector<16x1xf32>
    %100 = vector.broadcast %99 : vector<16x1xf32> to vector<16x128xf32>
    %101 = arith.mulf %96, %100 : vector<16x128xf32>
    %102 = vector.broadcast %80 : vector<1x128xf32> to vector<16x128xf32>
    %103 = arith.mulf %101, %102 : vector<16x128xf32>
    %104 = vector.broadcast %81 : vector<1x128xf32> to vector<16x128xf32>
    %105 = arith.addf %103, %104 : vector<16x128xf32>
    %106 = math.tanh %105 : vector<16x128xf32>
    %107 = arith.mulf %73, %106 : vector<16x128xf32>
    %c0_45 = arith.constant 0 : index
    %c0_46 = arith.constant 0 : index
    %108 = vector.load %arg14[%c0_45, %c0_46] : memref<16x128xf32, #tpu.memory_space<vmem>>, vector<16x128xf32>
    tpu.vector_store %arg14[%c0_45, %c0_46], %107 {strides = array<i32>} : memref<16x128xf32, #tpu.memory_space<vmem>>, vector<16x128xf32>,
    %c0_47 = arith.constant 0 : index
    %c0_48 = arith.constant 0 : index
    %109 = vector.load %arg15[%c0_47, %c0_48] : memref<16x128xf32, #tpu.memory_space<vmem>>, vector<16x128xf32>
    tpu.vector_store %arg15[%c0_47, %c0_48], %105 {strides = array<i32>} : memref<16x128xf32, #tpu.memory_space<vmem>>, vector<16x128xf32>,
    %110 = tpu.concatenate %107, %105 in 1 : vector<16x128xf32>, vector<16x128xf32> -> vector<16x256xf32>
    %c0_49 = arith.constant 0 : index
    %c0_50 = arith.constant 0 : index
    %c0_51 = arith.constant 0 : index
    %111 = vector.load %arg13[%c0_49, %c0_50, %c0_51] : memref<1x16x256xf32, #tpu.memory_space<vmem>>, vector<1x16x256xf32>
    %112 = vector.shape_cast %111 : vector<1x16x256xf32> to vector<16x256xf32>
    %113 = vector.shape_cast %110 : vector<16x256xf32> to vector<1x16x256xf32>
    tpu.vector_store %arg13[%c0_49, %c0_50, %c0_51], %113 {strides = array<i32>} : memref<1x16x256xf32, #tpu.memory_space<vmem>>, vector<1x16x256xf32>,
    return
  }
  func.func @transform_0(%arg0: i32, %arg1: i32) -> (i32, i32, i32) {
    %c0_i32 = arith.constant 0 : i32
    %c0_i32_0 = arith.constant 0 : i32
    return %arg1, %arg0, %c0_i32 : i32, i32, i32
  }
  func.func @transform_1(%arg0: i32, %arg1: i32) -> (i32, i32) {
    %c0_i32 = arith.constant 0 : i32
    %c0_i32_0 = arith.constant 0 : i32
    return %arg0, %c0_i32 : i32, i32
  }
  func.func @transform_2(%arg0: i32, %arg1: i32) -> (i32, i32) {
    %c0_i32 = arith.constant 0 : i32
    %c0_i32_0 = arith.constant 0 : i32
    return %arg0, %c0_i32 : i32, i32
  }
  func.func @transform_3(%arg0: i32, %arg1: i32) -> (i32, i32) {
    %c0_i32 = arith.constant 0 : i32
    %c0_i32_0 = arith.constant 0 : i32
    %c0_i32_1 = arith.constant 0 : i32
    return %c0_i32, %c0_i32_0 : i32, i32
  }
  func.func @transform_4(%arg0: i32, %arg1: i32) -> (i32, i32) {
    %c0_i32 = arith.constant 0 : i32
    %c0_i32_0 = arith.constant 0 : i32
    %c0_i32_1 = arith.constant 0 : i32
    return %c0_i32, %c0_i32_0 : i32, i32
  }
  func.func @transform_5(%arg0: i32, %arg1: i32) -> (i32, i32) {
    %c0_i32 = arith.constant 0 : i32
    %c0_i32_0 = arith.constant 0 : i32
    %c0_i32_1 = arith.constant 0 : i32
    return %c0_i32, %c0_i32_0 : i32, i32
  }
  func.func @transform_6(%arg0: i32, %arg1: i32) -> (i32, i32) {
    %c0_i32 = arith.constant 0 : i32
    %c0_i32_0 = arith.constant 0 : i32
    %c0_i32_1 = arith.constant 0 : i32
    return %c0_i32, %c0_i32_0 : i32, i32
  }
  func.func @transform_7(%arg0: i32, %arg1: i32) -> (i32, i32) {
    %c0_i32 = arith.constant 0 : i32
    %c0_i32_0 = arith.constant 0 : i32
    %c0_i32_1 = arith.constant 0 : i32
    return %c0_i32, %c0_i32_0 : i32, i32
  }
  func.func @transform_8(%arg0: i32, %arg1: i32) -> (i32, i32) {
    %c0_i32 = arith.constant 0 : i32
    %c0_i32_0 = arith.constant 0 : i32
    %c0_i32_1 = arith.constant 0 : i32
    return %c0_i32, %c0_i32_0 : i32, i32
  }
  func.func @transform_9(%arg0: i32, %arg1: i32) -> (i32, i32) {
    %c0_i32 = arith.constant 0 : i32
    %c0_i32_0 = arith.constant 0 : i32
    %c0_i32_1 = arith.constant 0 : i32
    return %c0_i32, %c0_i32_0 : i32, i32
  }
  func.func @transform_10(%arg0: i32, %arg1: i32) -> (i32, i32) {
    %c0_i32 = arith.constant 0 : i32
    %c0_i32_0 = arith.constant 0 : i32
    %c0_i32_1 = arith.constant 0 : i32
    return %c0_i32, %c0_i32_0 : i32, i32
  }
  func.func @transform_11(%arg0: i32, %arg1: i32) -> (i32, i32, i32) {
    %c0_i32 = arith.constant 0 : i32
    %c0_i32_0 = arith.constant 0 : i32
    return %arg1, %arg0, %c0_i32 : i32, i32, i32
  }
}

</mosaic_0001>

<llo_original>
// kernel: tpu_custom_call.1
$region0: #{tpu_custom_call.1}
  #allocation0 [shape = 'u32[]', space=smem, size = 0x4, offset = 0x4, fixed_abs, tag = 'smem constant byte address 0x4 - core index']
  #allocation1 [shape = 'u32[144,128]{1,0:T(1,128)}', space=vmem, size = 0x12000, scoped, tag = 'internal scratch']
  %s0 = inlined_call_operand.hbm [shape: f32[8,128], index: 0, kind: input, shape index: {}]
  %s1 = inlined_call_operand.hbm [shape: f32[16,256], index: 1, kind: output, shape index: {}]
  %s2 = sld [smem:[#allocation0]]
  $region41: #{tpu_custom_call.1} parent=0
    _
  %s4 = ssub.s32 1, %s2
  %s5 = scalar_select 0, %s4, %s2
  $region1: #{tpu_custom_call.1} parent=0
    #allocation2 [shape = 'u8[4096]{0}', space=vmem, size = 0x1000, scoped, tag = 'input window, operand 0, single buffered']
    #allocation3 [shape = 's32[2]{0}', space=sflag, size = 0x8, scoped, tag = 'scoped memory for tpu_custom_call.1']
    #allocation4 [shape = 's32[2]{0}', space=sflag, size = 0x8, scoped, tag = 'scoped memory for tpu_custom_call.1']
    #allocation5 [shape = 'u8[8192]{0}', space=vmem, size = 0x2000, scoped, tag = 'output window, operand 0']
    %6 = vsyncpa [#allocation3], 0
    %7 = vsyncpa [#allocation4], 0
    %s8 = scalar_lea.sflag [#allocation4], 1
    %9 = vsyncpa %s8, 0
    loop: start=0, step=1, limit=6
    $region2: #{tpu_custom_call.1} parent=1 // loop_pre_header
      _
    $region3: #{tpu_custom_call.1} parent=1 // loop_header
      %s11 = sphi 0, %s15
      %p12 = scmp.ge.s32.totalorder %s11, 6
      %s18 = sphi 0, %s30
      %s19 = sphi 0, %s26
      %s20 = sphi 0, %s18
      %s21 = sphi 0, %s19
      %s22 = sphi 0, %s20
      %s23 = sphi 0, %s21
      %s31 = sphi 0, %s31
      %s33 = sphi 0, %s31
      %s34 = sphi 0, %s33
      %s48 = sphi 0, %s34
      %s56 = sphi 0, %s58
      %s59 = sphi 0, %s56
      %s60 = sphi 0, %s59
      %s76 = sphi 0, %s60
    $region4: #{tpu_custom_call.1} parent=1 // loop_header_branch
      %14 = sbr.rel (%p12) target = $region8
    $region5: #{tpu_custom_call.1} parent=1 // loop_body
      %s16 = ssub.s32 %s11, 1
      %s17 = ssub.s32 %s11, 2
      %s24 = sadd.s32 1, %s19
      %p25 = scmp.ge.s32.totalorder %s24, 2
      %s26 = scalar_select %p25, 0, %s24
      %s27 = sadd.s32 1, %s18
      %s28 = scalar_select %p25, %s27, %s18
      %p29 = scmp.ge.s32.totalorder %s28, 2
      %s30 = scalar_select %p29, 0, %s28
      %s32 = sadd.s32 %s31, 1
      %p35 = scmp.eq.s32.totalorder %s11, 3
      %p36 = scmp.ne.s32.totalorder %s31, %s33
      %p37 = scmp.eq.s32.totalorder %s11, 0
      %p38 = por %p36, %p37
      %p39 = scmp.ne.s32.totalorder %s31, %s33
      %p40 = scmp.eq.s32.totalorder %s16, 3
      %p41 = por %p39, %p40
      %p42 = scmp.ne.s32.totalorder %s33, %s34
      %p43 = scmp.eq.s32.totalorder %s16, 0
      %p44 = por %p42, %p43
      %p45 = scmp.ne.s32.totalorder %s33, %s34
      %p46 = scmp.eq.s32.totalorder %s17, 3
      %p47 = por %p45, %p46
      %p49 = scmp.ne.s32.totalorder %s34, %s48
      %p50 = scmp.eq.s32.totalorder %s17, 0
      %p51 = por %p49, %p50
      %s52 = ssub.s32 %s18, %s30
      %s53 = ssub.s32 %s19, %s26
      %s54 = sor.u32 %s52, %s53
      %p55 = scmp.eq.s32.totalorder %s54, 0
      %s57 = sadd.s32 %s56, 1
      %s58 = scalar_select %p55, %s56, %s57
      %p61 = pneg %p55
      %p62 = scmp.eq.s32.totalorder %s11, 3
      %p63 = por %p61, %p62
      %p64 = scmp.ne.s32.totalorder %s56, %s59
      %p65 = scmp.eq.s32.totalorder %s11, 0
      %p66 = por %p64, %p65
      %p67 = scmp.ne.s32.totalorder %s56, %s59
      %p68 = scmp.eq.s32.totalorder %s16, 3
      %p69 = por %p67, %p68
      %p70 = scmp.ne.s32.totalorder %s59, %s60
      %p71 = scmp.eq.s32.totalorder %s16, 0
      %p72 = por %p70, %p71
      %p73 = scmp.ne.s32.totalorder %s59, %s60
      %p74 = scmp.eq.s32.totalorder %s17, 3
      %p75 = por %p73, %p74
      %p77 = scmp.ne.s32.totalorder %s60, %s76
      %p78 = scmp.eq.s32.totalorder %s17, 0
      %p79 = por %p77, %p78
      %p80 = scmp.le.s32.totalorder 1, %s11
      %p81 = scmp.lt.s32.totalorder %s11, 5
      %p82 = pnand %p80, %p81
      %p83 = pneg %p82
      // Predicated region
      $region9: #{tpu_custom_call.1} parent=5 // pred_check
        _
      $region10: #{tpu_custom_call.1} parent=5 // pred_check_branch
        %85 = sbr.rel (%p82) target = $region12
      $region11: #{tpu_custom_call.1} parent=5 // pred_region
        %s86 = ssub.s32 %s11, 1
        // Predicated region
        $region13: #{tpu_custom_call.1} parent=11 // pred_check
          %p87 = pneg %p44
        $region14: #{tpu_custom_call.1} parent=11 // pred_check_branch
          %89 = sbr.rel (%p87) target = $region16
        $region15: #{tpu_custom_call.1} parent=11 // pred_region
          %s91 = ssub.s32 128, 128
          %92 = vsyncadd [#allocation3], %s91
          %s94 = sshll.u32 [#allocation2], 4
          %s95 = int_to_ptr.vmem [resolvable:$true] %s94
          %97 = dma.hbm_to_vmem [thread:$0]  %s0, 128, %s95, [#allocation3]
        $region16: #{tpu_custom_call.1} parent=11 // pred_fallthru
          _
      $region12: #{tpu_custom_call.1} parent=5 // pred_fallthru
        _
      %p98 = scmp.lt.s32.totalorder %s11, 4
      // Predicated region
      $region17: #{tpu_custom_call.1} parent=5 // pred_check
        %p99 = pneg %p98
      $region18: #{tpu_custom_call.1} parent=5 // pred_check_branch
        %101 = sbr.rel (%p99) target = $region20
      $region19: #{tpu_custom_call.1} parent=5 // pred_region
        _
      $region20: #{tpu_custom_call.1} parent=5 // pred_fallthru
        _
      %p102 = scmp.le.s32.totalorder 1, %s11
      %p103 = scmp.lt.s32.totalorder %s11, 5
      %p104 = pnand %p102, %p103
      %p105 = pneg %p104
      // Predicated region
      $region21: #{tpu_custom_call.1} parent=5 // pred_check
        _
      $region22: #{tpu_custom_call.1} parent=5 // pred_check_branch
        %107 = sbr.rel (%p104) target = $region24
      $region23: #{tpu_custom_call.1} parent=5 // pred_region
        %s108 = ssub.s32 %s11, 1
        // Predicated region
        $region25: #{tpu_custom_call.1} parent=23 // pred_check
          %p109 = pneg %p44
        $region26: #{tpu_custom_call.1} parent=23 // pred_check_branch
          %111 = sbr.rel (%p109) target = $region28
        $region27: #{tpu_custom_call.1} parent=23 // pred_region
          %112 = dma.done [#allocation3], 128
        $region28: #{tpu_custom_call.1} parent=23 // pred_fallthru
          _
        %p113 = pneg %p44
        %p114 = pneg %p41
        %p115 = pneg %p72
        %p116 = pneg %p69
        %s117 = sand.u32 %s59, 1
        %s118 = scalar_lea.sflag [#allocation4], %s117
        %s119 = sand.u32 %s59, 1
        %s120 = smul.addr %s119, 8
        %s121 = scalar_lea.vmem [#allocation5], %s120
        %v122 = vld [vmem:[#allocation2] sm:$0xff]
        %123 = vst [vmem:[%s121] sm:$0xff] %v122
        %s124 = sand.u32 %s59, 1
        %s125 = scalar_lea.sflag [#allocation4], %s124
        %s126 = sand.u32 %s59, 1
        %s127 = smul.addr %s126, 8
        %s128 = scalar_lea.vmem [#allocation5], %s127
        // Predicated region
        $region29: #{tpu_custom_call.1} parent=23 // pred_check
          %p129 = pneg %p69
        $region30: #{tpu_custom_call.1} parent=23 // pred_check_branch
          %131 = sbr.rel (%p129) target = $region32
        $region31: #{tpu_custom_call.1} parent=23 // pred_region
          %s133 = ssub.s32 128, 128
          %134 = vsyncadd %s125, %s133
          %s135 = smul.addr %s20, 2
          %s136 = sadd.s32 %s21, %s135
          %s137 = smul.addr %s136, 128
          %s138 = scalar_lea.hbm %s1, %s137
          %s140 = sshll.u32 %s128, 4
          %s141 = int_to_ptr.vmem [resolvable:$true] %s140
          %143 = dma.vmem_to_hbm [thread:$0]  %s141, 128, %s138, %s125
        $region32: #{tpu_custom_call.1} parent=23 // pred_fallthru
          _
      $region24: #{tpu_custom_call.1} parent=5 // pred_fallthru
        _
      %p144 = scmp.le.s32.totalorder 2, %s11
      // Predicated region
      $region33: #{tpu_custom_call.1} parent=5 // pred_check
        %p145 = pneg %p144
      $region34: #{tpu_custom_call.1} parent=5 // pred_check_branch
        %147 = sbr.rel (%p145) target = $region36
      $region35: #{tpu_custom_call.1} parent=5 // pred_region
        %s148 = ssub.s32 %s11, 2
        // Predicated region
        $region37: #{tpu_custom_call.1} parent=35 // pred_check
          %p149 = pneg %p75
        $region38: #{tpu_custom_call.1} parent=35 // pred_check_branch
          %151 = sbr.rel (%p149) target = $region40
        $region39: #{tpu_custom_call.1} parent=35 // pred_region
          %s152 = sand.u32 %s60, 1
          %s153 = scalar_lea.sflag [#allocation4], %s152
          %s154 = sand.u32 %s60, 1
          %s155 = smul.addr %s154, 8
          %s156 = scalar_lea.vmem [#allocation5], %s155
          %157 = dma.done %s153, 128
        $region40: #{tpu_custom_call.1} parent=35 // pred_fallthru
          _
      $region36: #{tpu_custom_call.1} parent=5 // pred_fallthru
        _
    $region6: #{tpu_custom_call.1} parent=1 // loop_footer
      %s15 = sadd.s32 1, %s11
    $region7: #{tpu_custom_call.1} parent=1 // loop_footer_branch
      %10 = sbr.rel target = $region3
    $region8: #{tpu_custom_call.1} parent=1 // loop_exit
      _
    %158 = vsyncpa [#allocation3], 1
    %s159 = scalar_lea.sflag [#allocation3], 1
    %160 = vsyncpa %s159, 1
    %161 = vsyncpa [#allocation4], 1
    %s162 = scalar_lea.sflag [#allocation4], 1
    %163 = vsyncpa %s162, 1

// kernel: tpu_custom_call.1
$region0: #{tpu_custom_call.1}
  #allocation0 [shape = 'u32[]', space=smem, size = 0x4, offset = 0x4, fixed_abs, tag = 'smem constant byte address 0x4 - core index']
  #allocation1 [shape = 'u32[144,128]{1,0:T(1,128)}', space=vmem, size = 0x12000, scoped, tag = 'internal scratch']
  #allocation2 [shape = 'f32[16,128]{1,0:T(8,128)}', space=vmem, size = 0x2000, scoped, tag = 'scratch operand']
  #allocation3 [shape = 'f32[16,128]{1,0:T(8,128)}', space=vmem, size = 0x2000, scoped, tag = 'scratch operand']
  %s0 = inlined_call_operand.hbm [shape: f32[1,32,128], index: 0, kind: input, shape index: {}]
  %s1 = inlined_call_operand.hbm [shape: f32[32,128], index: 1, kind: input, shape index: {}]
  %s2 = inlined_call_operand.hbm [shape: f32[32,128], index: 2, kind: input, shape index: {}]
  %s3 = inlined_call_operand.hbm [shape: f32[128,512], index: 3, kind: input, shape index: {}]
  %s4 = inlined_call_operand.hbm [shape: f32[128,512], index: 4, kind: input, shape index: {}]
  %s5 = inlined_call_operand.vmem [shape: f32[1,512], index: 5, kind: input, shape index: {}]
  %s6 = inlined_call_operand.vmem [shape: f32[1,512], index: 6, kind: input, shape index: {}]
  %s7 = inlined_call_operand.vmem [shape: f32[1,512], index: 7, kind: input, shape index: {}]
  %s8 = inlined_call_operand.vmem [shape: f32[1,512], index: 8, kind: input, shape index: {}]
  %s9 = inlined_call_operand.vmem [shape: f32[1,128], index: 9, kind: input, shape index: {}]
  %s10 = inlined_call_operand.vmem [shape: f32[1,128], index: 10, kind: input, shape index: {}]
  %s11 = inlined_call_operand.hbm [shape: f32[1,32,256], index: 11, kind: output, shape index: {}]
  %s12 = sld [smem:[#allocation0]]
  $region101: #{tpu_custom_call.1} parent=0
    _
  %s14 = ssub.s32 1, %s12
  %s15 = scalar_select 0, %s14, %s12
  $region1: #{tpu_custom_call.1} parent=0
    #allocation4 [shape = 'u8[16384]{0}', space=vmem, size = 0x4000, scoped, tag = 'input window, operand 0']
    #allocation5 [shape = 's32[2]{0}', space=sflag, size = 0x8, scoped, tag = 'scoped memory for tpu_custom_call.1']
    #allocation6 [shape = 's32[2]{0}', space=sflag, size = 0x8, scoped, tag = 'scoped memory for tpu_custom_call.1']
    #allocation7 [shape = 'u8[16384]{0}', space=vmem, size = 0x4000, scoped, tag = 'input window, operand 1']
    #allocation8 [shape = 's32[2]{0}', space=sflag, size = 0x8, scoped, tag = 'scoped memory for tpu_custom_call.1']
    #allocation9 [shape = 'u8[16384]{0}', space=vmem, size = 0x4000, scoped, tag = 'input window, operand 2']
    #allocation10 [shape = 'u8[262144]{0}', space=vmem, size = 0x40000, scoped, tag = 'input window, operand 3, single buffered']
    #allocation11 [shape = 's32[1]{0}', space=sflag, size = 0x4, scoped, tag = 'scoped memory for tpu_custom_call.1']
    #allocation12 [shape = 'u8[262144]{0}', space=vmem, size = 0x40000, scoped, tag = 'input window, operand 4, single buffered']
    #allocation13 [shape = 'u8[32768]{0}', space=vmem, size = 0x8000, scoped, tag = 'output window, operand 0']
    %16 = vsyncpa [#allocation5], 0
    %s17 = scalar_lea.sflag [#allocation5], 1
    %18 = vsyncpa %s17, 0
    %19 = vsyncpa [#allocation8], 0
    %s20 = scalar_lea.sflag [#allocation8], 1
    %21 = vsyncpa %s20, 0
    %22 = vsyncpa [#allocation11], 0
    %23 = vsyncpa [#allocation6], 0
    %s24 = scalar_lea.sflag [#allocation6], 1
    %25 = vsyncpa %s24, 0
    loop: start=0, step=1, limit=4
    $region2: #{tpu_custom_call.1} parent=1 // loop_pre_header
      _
    $region3: #{tpu_custom_call.1} parent=1 // loop_header
      %s27 = sphi 0, %s31
      %p28 = scmp.ge.s32.totalorder %s27, 4
      %s34 = sphi 0, %s46
      %s35 = sphi 0, %s42
      %s36 = sphi 0, %s34
      %s37 = sphi 0, %s35
      %s38 = sphi 0, %s36
      %s39 = sphi 0, %s37
      %s51 = sphi 0, %s53
      %s54 = sphi 0, %s51
      %s55 = sphi 0, %s54
      %s71 = sphi 0, %s55
      %s77 = sphi 0, %s79
      %s80 = sphi 0, %s77
      %s81 = sphi 0, %s80
      %s97 = sphi 0, %s81
      %s103 = sphi 0, %s105
      %s106 = sphi 0, %s103
      %s107 = sphi 0, %s106
      %s123 = sphi 0, %s107
      %s127 = sphi 0, %s127
      %s129 = sphi 0, %s127
      %s130 = sphi 0, %s129
      %s144 = sphi 0, %s130
      %s148 = sphi 0, %s148
      %s150 = sphi 0, %s148
      %s151 = sphi 0, %s150
      %s165 = sphi 0, %s151
      %s169 = sphi 0, %s169
      %s171 = sphi 0, %s169
      %s172 = sphi 0, %s171
      %s186 = sphi 0, %s172
      %s190 = sphi 0, %s190
      %s192 = sphi 0, %s190
      %s193 = sphi 0, %s192
      %s207 = sphi 0, %s193
      %s211 = sphi 0, %s211
      %s213 = sphi 0, %s211
      %s214 = sphi 0, %s213
      %s228 = sphi 0, %s214
      %s232 = sphi 0, %s232
      %s234 = sphi 0, %s232
      %s235 = sphi 0, %s234
      %s249 = sphi 0, %s235
      %s253 = sphi 0, %s253
      %s255 = sphi 0, %s253
      %s256 = sphi 0, %s255
      %s270 = sphi 0, %s256
      %s274 = sphi 0, %s274
      %s276 = sphi 0, %s274
      %s277 = sphi 0, %s276
      %s291 = sphi 0, %s277
      %s299 = sphi 0, %s301
      %s302 = sphi 0, %s299
      %s303 = sphi 0, %s302
      %s319 = sphi 0, %s303
    $region4: #{tpu_custom_call.1} parent=1 // loop_header_branch
      %30 = sbr.rel (%p28) target = $region8
    $region5: #{tpu_custom_call.1} parent=1 // loop_body
      %s32 = ssub.s32 %s27, 1
      %s33 = ssub.s32 %s27, 2
      %s40 = sadd.s32 1, %s35
      %p41 = scmp.ge.s32.totalorder %s40, 1
      %s42 = scalar_select %p41, 0, %s40
      %s43 = sadd.s32 1, %s34
      %s44 = scalar_select %p41, %s43, %s34
      %p45 = scmp.ge.s32.totalorder %s44, 2
      %s46 = scalar_select %p45, 0, %s44
      %s47 = ssub.s32 %s35, %s42
      %s48 = ssub.s32 %s34, %s46
      %s49 = sor.u32 %s47, %s48
      %p50 = scmp.eq.s32.totalorder %s49, 0
      %s52 = sadd.s32 %s51, 1
      %s53 = scalar_select %p50, %s51, %s52
      %p56 = pneg %p50
      %p57 = scmp.eq.s32.totalorder %s27, 1
      %p58 = por %p56, %p57
      %p59 = scmp.ne.s32.totalorder %s51, %s54
      %p60 = scmp.eq.s32.totalorder %s27, 0
      %p61 = por %p59, %p60
      %p62 = scmp.ne.s32.totalorder %s51, %s54
      %p63 = scmp.eq.s32.totalorder %s32, 1
      %p64 = por %p62, %p63
      %p65 = scmp.ne.s32.totalorder %s54, %s55
      %p66 = scmp.eq.s32.totalorder %s32, 0
      %p67 = por %p65, %p66
      %p68 = scmp.ne.s32.totalorder %s54, %s55
      %p69 = scmp.eq.s32.totalorder %s33, 1
      %p70 = por %p68, %p69
      %p72 = scmp.ne.s32.totalorder %s55, %s71
      %p73 = scmp.eq.s32.totalorder %s33, 0
      %p74 = por %p72, %p73
      %s75 = ssub.s32 %s34, %s46
      %p76 = scmp.eq.s32.totalorder %s75, 0
      %s78 = sadd.s32 %s77, 1
      %s79 = scalar_select %p76, %s77, %s78
      %p82 = pneg %p76
      %p83 = scmp.eq.s32.totalorder %s27, 1
      %p84 = por %p82, %p83
      %p85 = scmp.ne.s32.totalorder %s77, %s80
      %p86 = scmp.eq.s32.totalorder %s27, 0
      %p87 = por %p85, %p86
      %p88 = scmp.ne.s32.totalorder %s77, %s80
      %p89 = scmp.eq.s32.totalorder %s32, 1
      %p90 = por %p88, %p89
      %p91 = scmp.ne.s32.totalorder %s80, %s81
      %p92 = scmp.eq.s32.totalorder %s32, 0
      %p93 = por %p91, %p92
      %p94 = scmp.ne.s32.totalorder %s80, %s81
      %p95 = scmp.eq.s32.totalorder %s33, 1
      %p96 = por %p94, %p95
      %p98 = scmp.ne.s32.totalorder %s81, %s97
      %p99 = scmp.eq.s32.totalorder %s33, 0
      %p100 = por %p98, %p99
      %s101 = ssub.s32 %s34, %s46
      %p102 = scmp.eq.s32.totalorder %s101, 0
      %s104 = sadd.s32 %s103, 1
      %s105 = scalar_select %p102, %s103, %s104
      %p108 = pneg %p102
      %p109 = scmp.eq.s32.totalorder %s27, 1
      %p110 = por %p108, %p109
      %p111 = scmp.ne.s32.totalorder %s103, %s106
      %p112 = scmp.eq.s32.totalorder %s27, 0
      %p113 = por %p111, %p112
      %p114 = scmp.ne.s32.totalorder %s103, %s106
      %p115 = scmp.eq.s32.totalorder %s32, 1
      %p116 = por %p114, %p115
      %p117 = scmp.ne.s32.totalorder %s106, %s107
      %p118 = scmp.eq.s32.totalorder %s32, 0
      %p119 = por %p117, %p118
      %p120 = scmp.ne.s32.totalorder %s106, %s107
      %p121 = scmp.eq.s32.totalorder %s33, 1
      %p122 = por %p120, %p121
      %p124 = scmp.ne.s32.totalorder %s107, %s123
      %p125 = scmp.eq.s32.totalorder %s33, 0
      %p126 = por %p124, %p125
      %s128 = sadd.s32 %s127, 1
      %p131 = scmp.eq.s32.totalorder %s27, 1
      %p132 = scmp.ne.s32.totalorder %s127, %s129
      %p133 = scmp.eq.s32.totalorder %s27, 0
      %p134 = por %p132, %p133
      %p135 = scmp.ne.s32.totalorder %s127, %s129
      %p136 = scmp.eq.s32.totalorder %s32, 1
      %p137 = por %p135, %p136
      %p138 = scmp.ne.s32.totalorder %s129, %s130
      %p139 = scmp.eq.s32.totalorder %s32, 0
      %p140 = por %p138, %p139
      %p141 = scmp.ne.s32.totalorder %s129, %s130
      %p142 = scmp.eq.s32.totalorder %s33, 1
      %p143 = por %p141, %p142
      %p145 = scmp.ne.s32.totalorder %s130, %s144
      %p146 = scmp.eq.s32.totalorder %s33, 0
      %p147 = por %p145, %p146
      %s149 = sadd.s32 %s148, 1
      %p152 = scmp.eq.s32.totalorder %s27, 1
      %p153 = scmp.ne.s32.totalorder %s148, %s150
      %p154 = scmp.eq.s32.totalorder %s27, 0
      %p155 = por %p153, %p154
      %p156 = scmp.ne.s32.totalorder %s148, %s150
      %p157 = scmp.eq.s32.totalorder %s32, 1
      %p158 = por %p156, %p157
      %p159 = scmp.ne.s32.totalorder %s150, %s151
      %p160 = scmp.eq.s32.totalorder %s32, 0
      %p161 = por %p159, %p160
      %p162 = scmp.ne.s32.totalorder %s150, %s151
      %p163 = scmp.eq.s32.totalorder %s33, 1
      %p164 = por %p162, %p163
      %p166 = scmp.ne.s32.totalorder %s151, %s165
      %p167 = scmp.eq.s32.totalorder %s33, 0
      %p168 = por %p166, %p167
      %s170 = sadd.s32 %s169, 1
      %p173 = scmp.eq.s32.totalorder %s27, 1
      %p174 = scmp.ne.s32.totalorder %s169, %s171
      %p175 = scmp.eq.s32.totalorder %s27, 0
      %p176 = por %p174, %p175
      %p177 = scmp.ne.s32.totalorder %s169, %s171
      %p178 = scmp.eq.s32.totalorder %s32, 1
      %p179 = por %p177, %p178
      %p180 = scmp.ne.s32.totalorder %s171, %s172
      %p181 = scmp.eq.s32.totalorder %s32, 0
      %p182 = por %p180, %p181
      %p183 = scmp.ne.s32.totalorder %s171, %s172
      %p184 = scmp.eq.s32.totalorder %s33, 1
      %p185 = por %p183, %p184
      %p187 = scmp.ne.s32.totalorder %s172, %s186
      %p188 = scmp.eq.s32.totalorder %s33, 0
      %p189 = por %p187, %p188
      %s191 = sadd.s32 %s190, 1
      %p194 = scmp.eq.s32.totalorder %s27, 1
      %p195 = scmp.ne.s32.totalorder %s190, %s192
      %p196 = scmp.eq.s32.totalorder %s27, 0
      %p197 = por %p195, %p196
      %p198 = scmp.ne.s32.totalorder %s190, %s192
      %p199 = scmp.eq.s32.totalorder %s32, 1
      %p200 = por %p198, %p199
      %p201 = scmp.ne.s32.totalorder %s192, %s193
      %p202 = scmp.eq.s32.totalorder %s32, 0
      %p203 = por %p201, %p202
      %p204 = scmp.ne.s32.totalorder %s192, %s193
      %p205 = scmp.eq.s32.totalorder %s33, 1
      %p206 = por %p204, %p205
      %p208 = scmp.ne.s32.totalorder %s193, %s207
      %p209 = scmp.eq.s32.totalorder %s33, 0
      %p210 = por %p208, %p209
      %s212 = sadd.s32 %s211, 1
      %p215 = scmp.eq.s32.totalorder %s27, 1
      %p216 = scmp.ne.s32.totalorder %s211, %s213
      %p217 = scmp.eq.s32.totalorder %s27, 0
      %p218 = por %p216, %p217
      %p219 = scmp.ne.s32.totalorder %s211, %s213
      %p220 = scmp.eq.s32.totalorder %s32, 1
      %p221 = por %p219, %p220
      %p222 = scmp.ne.s32.totalorder %s213, %s214
      %p223 = scmp.eq.s32.totalorder %s32, 0
      %p224 = por %p222, %p223
      %p225 = scmp.ne.s32.totalorder %s213, %s214
      %p226 = scmp.eq.s32.totalorder %s33, 1
      %p227 = por %p225, %p226
      %p229 = scmp.ne.s32.totalorder %s214, %s228
      %p230 = scmp.eq.s32.totalorder %s33, 0
      %p231 = por %p229, %p230
      %s233 = sadd.s32 %s232, 1
      %p236 = scmp.eq.s32.totalorder %s27, 1
      %p237 = scmp.ne.s32.totalorder %s232, %s234
      %p238 = scmp.eq.s32.totalorder %s27, 0
      %p239 = por %p237, %p238
      %p240 = scmp.ne.s32.totalorder %s232, %s234
      %p241 = scmp.eq.s32.totalorder %s32, 1
      %p242 = por %p240, %p241
      %p243 = scmp.ne.s32.totalorder %s234, %s235
      %p244 = scmp.eq.s32.totalorder %s32, 0
      %p245 = por %p243, %p244
      %p246 = scmp.ne.s32.totalorder %s234, %s235
      %p247 = scmp.eq.s32.totalorder %s33, 1
      %p248 = por %p246, %p247
      %p250 = scmp.ne.s32.totalorder %s235, %s249
      %p251 = scmp.eq.s32.totalorder %s33, 0
      %p252 = por %p250, %p251
      %s254 = sadd.s32 %s253, 1
      %p257 = scmp.eq.s32.totalorder %s27, 1
      %p258 = scmp.ne.s32.totalorder %s253, %s255
      %p259 = scmp.eq.s32.totalorder %s27, 0
      %p260 = por %p258, %p259
      %p261 = scmp.ne.s32.totalorder %s253, %s255
      %p262 = scmp.eq.s32.totalorder %s32, 1
      %p263 = por %p261, %p262
      %p264 = scmp.ne.s32.totalorder %s255, %s256
      %p265 = scmp.eq.s32.totalorder %s32, 0
      %p266 = por %p264, %p265
      %p267 = scmp.ne.s32.totalorder %s255, %s256
      %p268 = scmp.eq.s32.totalorder %s33, 1
      %p269 = por %p267, %p268
      %p271 = scmp.ne.s32.totalorder %s256, %s270
      %p272 = scmp.eq.s32.totalorder %s33, 0
      %p273 = por %p271, %p272
      %s275 = sadd.s32 %s274, 1
      %p278 = scmp.eq.s32.totalorder %s27, 1
      %p279 = scmp.ne.s32.totalorder %s274, %s276
      %p280 = scmp.eq.s32.totalorder %s27, 0
      %p281 = por %p279, %p280
      %p282 = scmp.ne.s32.totalorder %s274, %s276
      %p283 = scmp.eq.s32.totalorder %s32, 1
      %p284 = por %p282, %p283
      %p285 = scmp.ne.s32.totalorder %s276, %s277
      %p286 = scmp.eq.s32.totalorder %s32, 0
      %p287 = por %p285, %p286
      %p288 = scmp.ne.s32.totalorder %s276, %s277
      %p289 = scmp.eq.s32.totalorder %s33, 1
      %p290 = por %p288, %p289
      %p292 = scmp.ne.s32.totalorder %s277, %s291
      %p293 = scmp.eq.s32.totalorder %s33, 0
      %p294 = por %p292, %p293
      %s295 = ssub.s32 %s35, %s42
      %s296 = ssub.s32 %s34, %s46
      %s297 = sor.u32 %s295, %s296
      %p298 = scmp.eq.s32.totalorder %s297, 0
      %s300 = sadd.s32 %s299, 1
      %s301 = scalar_select %p298, %s299, %s300
      %p304 = pneg %p298
      %p305 = scmp.eq.s32.totalorder %s27, 1
      %p306 = por %p304, %p305
      %p307 = scmp.ne.s32.totalorder %s299, %s302
      %p308 = scmp.eq.s32.totalorder %s27, 0
      %p309 = por %p307, %p308
      %p310 = scmp.ne.s32.totalorder %s299, %s302
      %p311 = scmp.eq.s32.totalorder %s32, 1
      %p312 = por %p310, %p311
      %p313 = scmp.ne.s32.totalorder %s302, %s303
      %p314 = scmp.eq.s32.totalorder %s32, 0
      %p315 = por %p313, %p314
      %p316 = scmp.ne.s32.totalorder %s302, %s303
      %p317 = scmp.eq.s32.totalorder %s33, 1
      %p318 = por %p316, %p317
      %p320 = scmp.ne.s32.totalorder %s303, %s319
      %p321 = scmp.eq.s32.totalorder %s33, 0
      %p322 = por %p320, %p321
      %p323 = scmp.le.s32.totalorder 1, %s27
      %p324 = scmp.lt.s32.totalorder %s27, 3
      %p325 = pnand %p323, %p324
      %p326 = pneg %p325
      // Predicated region
      $region9: #{tpu_custom_call.1} parent=5 // pred_check
        _
      $region10: #{tpu_custom_call.1} parent=5 // pred_check_branch
        %328 = sbr.rel (%p325) target = $region12
      $region11: #{tpu_custom_call.1} parent=5 // pred_region
        %s329 = ssub.s32 %s27, 1
        // Predicated region
        $region13: #{tpu_custom_call.1} parent=11 // pred_check
          %p330 = pneg %p140
        $region14: #{tpu_custom_call.1} parent=11 // pred_check_branch
          %332 = sbr.rel (%p330) target = $region16
        $region15: #{tpu_custom_call.1} parent=11 // pred_region
          %s334 = ssub.s32 8192, 8192
          %335 = vsyncadd [#allocation11], %s334
          %s336 = sshll.u32 [#allocation10], 4
          %s337 = int_to_ptr.vmem [resolvable:$true] %s336
          %342 = dma.hbm_to_vmem [thread:$0]  %s3, 8192, %s337, [#allocation11], 512, 512, 32
        $region16: #{tpu_custom_call.1} parent=11 // pred_fallthru
          _
        // Predicated region
        $region17: #{tpu_custom_call.1} parent=11 // pred_check
          %p343 = pneg %p161
        $region18: #{tpu_custom_call.1} parent=11 // pred_check_branch
          %345 = sbr.rel (%p343) target = $region20
        $region19: #{tpu_custom_call.1} parent=11 // pred_region
          %s347 = ssub.s32 8192, 8192
          %348 = vsyncadd [#allocation11], %s347
          %s349 = sshll.u32 [#allocation12], 4
          %s350 = int_to_ptr.vmem [resolvable:$true] %s349
          %355 = dma.hbm_to_vmem [thread:$0]  %s4, 8192, %s350, [#allocation11], 512, 512, 32
        $region20: #{tpu_custom_call.1} parent=11 // pred_fallthru
          _
        // Predicated region
        $region21: #{tpu_custom_call.1} parent=11 // pred_check
          %p356 = pneg %p182
        $region22: #{tpu_custom_call.1} parent=11 // pred_check_branch
          %358 = sbr.rel (%p356) target = $region24
        $region23: #{tpu_custom_call.1} parent=11 // pred_region
          _
        $region24: #{tpu_custom_call.1} parent=11 // pred_fallthru
          _
        // Predicated region
        $region25: #{tpu_custom_call.1} parent=11 // pred_check
          %p359 = pneg %p203
        $region26: #{tpu_custom_call.1} parent=11 // pred_check_branch
          %361 = sbr.rel (%p359) target = $region28
        $region27: #{tpu_custom_call.1} parent=11 // pred_region
          _
        $region28: #{tpu_custom_call.1} parent=11 // pred_fallthru
          _
        // Predicated region
        $region29: #{tpu_custom_call.1} parent=11 // pred_check
          %p362 = pneg %p224
        $region30: #{tpu_custom_call.1} parent=11 // pred_check_branch
          %364 = sbr.rel (%p362) target = $region32
        $region31: #{tpu_custom_call.1} parent=11 // pred_region
          _
        $region32: #{tpu_custom_call.1} parent=11 // pred_fallthru
          _
        // Predicated region
        $region33: #{tpu_custom_call.1} parent=11 // pred_check
          %p365 = pneg %p245
        $region34: #{tpu_custom_call.1} parent=11 // pred_check_branch
          %367 = sbr.rel (%p365) target = $region36
        $region35: #{tpu_custom_call.1} parent=11 // pred_region
          _
        $region36: #{tpu_custom_call.1} parent=11 // pred_fallthru
          _
        // Predicated region
        $region37: #{tpu_custom_call.1} parent=11 // pred_check
          %p368 = pneg %p266
        $region38: #{tpu_custom_call.1} parent=11 // pred_check_branch
          %370 = sbr.rel (%p368) target = $region40
        $region39: #{tpu_custom_call.1} parent=11 // pred_region
          _
        $region40: #{tpu_custom_call.1} parent=11 // pred_fallthru
          _
        // Predicated region
        $region41: #{tpu_custom_call.1} parent=11 // pred_check
          %p371 = pneg %p287
        $region42: #{tpu_custom_call.1} parent=11 // pred_check_branch
          %373 = sbr.rel (%p371) target = $region44
        $region43: #{tpu_custom_call.1} parent=11 // pred_region
          _
        $region44: #{tpu_custom_call.1} parent=11 // pred_fallthru
          _
      $region12: #{tpu_custom_call.1} parent=5 // pred_fallthru
        _
      %p374 = scmp.lt.s32.totalorder %s27, 2
      // Predicated region
      $region45: #{tpu_custom_call.1} parent=5 // pred_check
        %p375 = pneg %p374
      $region46: #{tpu_custom_call.1} parent=5 // pred_check_branch
        %377 = sbr.rel (%p375) target = $region48
      $region47: #{tpu_custom_call.1} parent=5 // pred_region
        // Predicated region
        $region49: #{tpu_custom_call.1} parent=47 // pred_check
          %p378 = pneg %p61
        $region50: #{tpu_custom_call.1} parent=47 // pred_check_branch
          %380 = sbr.rel (%p378) target = $region52
        $region51: #{tpu_custom_call.1} parent=47 // pred_region
          %s381 = sand.u32 %s51, 1
          %s382 = scalar_lea.sflag [#allocation5], %s381
          %s383 = sand.u32 %s51, 1
          %s384 = smul.addr %s383, 16
          %s385 = scalar_lea.vmem [#allocation4], %s384
          %s386 = smul.u32 2, %s34
          %s388 = ssub.s32 256, 256
          %389 = vsyncadd %s382, %s388
          %s390 = smul.addr %s35, 4
          %s391 = sadd.s32 %s386, %s390
          %s392 = smul.addr %s391, 128
          %s393 = scalar_lea.hbm %s0, %s392
          %s394 = sshll.u32 %s385, 4
          %s395 = int_to_ptr.vmem [resolvable:$true] %s394
          %400 = dma.hbm_to_vmem [thread:$0]  %s393, 256, %s395, %s382, 128, 128, 8
        $region52: #{tpu_custom_call.1} parent=47 // pred_fallthru
          _
        // Predicated region
        $region53: #{tpu_custom_call.1} parent=47 // pred_check
          %p401 = pneg %p87
        $region54: #{tpu_custom_call.1} parent=47 // pred_check_branch
          %403 = sbr.rel (%p401) target = $region56
        $region55: #{tpu_custom_call.1} parent=47 // pred_region
          %s404 = sand.u32 %s27, 1
          %s405 = scalar_lea.sflag [#allocation8], %s404
          %s406 = sand.u32 %s77, 1
          %s407 = smul.addr %s406, 16
          %s408 = scalar_lea.vmem [#allocation7], %s407
          %s409 = smul.u32 2, %s34
          %s411 = ssub.s32 256, 256
          %412 = vsyncadd %s405, %s411
          %s413 = smul.addr %s409, 128
          %s414 = scalar_lea.hbm %s1, %s413
          %s415 = sshll.u32 %s408, 4
          %s416 = int_to_ptr.vmem [resolvable:$true] %s415
          %421 = dma.hbm_to_vmem [thread:$0]  %s414, 256, %s416, %s405, 128, 128, 8
        $region56: #{tpu_custom_call.1} parent=47 // pred_fallthru
          _
        // Predicated region
        $region57: #{tpu_custom_call.1} parent=47 // pred_check
          %p422 = pneg %p113
        $region58: #{tpu_custom_call.1} parent=47 // pred_check_branch
          %424 = sbr.rel (%p422) target = $region60
        $region59: #{tpu_custom_call.1} parent=47 // pred_region
          %s425 = sand.u32 %s27, 1
          %s426 = scalar_lea.sflag [#allocation8], %s425
          %s427 = sand.u32 %s103, 1
          %s428 = smul.addr %s427, 16
          %s429 = scalar_lea.vmem [#allocation9], %s428
          %s430 = smul.u32 2, %s34
          %s432 = ssub.s32 256, 256
          %433 = vsyncadd %s426, %s432
          %s434 = smul.addr %s430, 128
          %s435 = scalar_lea.hbm %s2, %s434
          %s436 = sshll.u32 %s429, 4
          %s437 = int_to_ptr.vmem [resolvable:$true] %s436
          %442 = dma.hbm_to_vmem [thread:$0]  %s435, 256, %s437, %s426, 128, 128, 8
        $region60: #{tpu_custom_call.1} parent=47 // pred_fallthru
          _
      $region48: #{tpu_custom_call.1} parent=5 // pred_fallthru
        _
      %p443 = scmp.le.s32.totalorder 1, %s27
      %p444 = scmp.lt.s32.totalorder %s27, 3
      %p445 = pnand %p443, %p444
      %p446 = pneg %p445
      // Predicated region
      $region61: #{tpu_custom_call.1} parent=5 // pred_check
        _
      $region62: #{tpu_custom_call.1} parent=5 // pred_check_branch
        %448 = sbr.rel (%p445) target = $region64
      $region63: #{tpu_custom_call.1} parent=5 // pred_region
        %s449 = ssub.s32 %s27, 1
        %s450 = sand.u32 %s54, 1
        %s451 = scalar_lea.sflag [#allocation5], %s450
        %s452 = sand.u32 %s54, 1
        %s453 = smul.addr %s452, 16
        %s454 = scalar_lea.vmem [#allocation4], %s453
        // Predicated region
        $region65: #{tpu_custom_call.1} parent=63 // pred_check
          %p455 = pneg %p67
        $region66: #{tpu_custom_call.1} parent=63 // pred_check_branch
          %457 = sbr.rel (%p455) target = $region68
        $region67: #{tpu_custom_call.1} parent=63 // pred_region
          %458 = dma.done %s451, 256
        $region68: #{tpu_custom_call.1} parent=63 // pred_fallthru
          _
        %s459 = sand.u32 %s32, 1
        %s460 = scalar_lea.sflag [#allocation8], %s459
        %s461 = sand.u32 %s80, 1
        %s462 = smul.addr %s461, 16
        %s463 = scalar_lea.vmem [#allocation7], %s462
        // Predicated region
        $region69: #{tpu_custom_call.1} parent=63 // pred_check
          %p464 = pneg %p93
        $region70: #{tpu_custom_call.1} parent=63 // pred_check_branch
          %466 = sbr.rel (%p464) target = $region72
        $region71: #{tpu_custom_call.1} parent=63 // pred_region
          %467 = dma.done %s460, 256
        $region72: #{tpu_custom_call.1} parent=63 // pred_fallthru
          _
        %s468 = sand.u32 %s32, 1
        %s469 = scalar_lea.sflag [#allocation8], %s468
        %s470 = sand.u32 %s106, 1
        %s471 = smul.addr %s470, 16
        %s472 = scalar_lea.vmem [#allocation9], %s471
        // Predicated region
        $region73: #{tpu_custom_call.1} parent=63 // pred_check
          %p473 = pneg %p119
        $region74: #{tpu_custom_call.1} parent=63 // pred_check_branch
          %475 = sbr.rel (%p473) target = $region76
        $region75: #{tpu_custom_call.1} parent=63 // pred_region
          %476 = dma.done %s469, 256
        $region76: #{tpu_custom_call.1} parent=63 // pred_fallthru
          _
        // Predicated region
        $region77: #{tpu_custom_call.1} parent=63 // pred_check
          %p477 = pneg %p140
        $region78: #{tpu_custom_call.1} parent=63 // pred_check_branch
          %479 = sbr.rel (%p477) target = $region80
        $region79: #{tpu_custom_call.1} parent=63 // pred_region
          %480 = dma.done [#allocation11], 8192
        $region80: #{tpu_custom_call.1} parent=63 // pred_fallthru
          _
        // Predicated region
        $region81: #{tpu_custom_call.1} parent=63 // pred_check
          %p481 = pneg %p161
        $region82: #{tpu_custom_call.1} parent=63 // pred_check_branch
          %483 = sbr.rel (%p481) target = $region84
        $region83: #{tpu_custom_call.1} parent=63 // pred_region
          %484 = dma.done [#allocation11], 8192
        $region84: #{tpu_custom_call.1} parent=63 // pred_fallthru
          _
        %s485 = sand.u32 %s54, 1
        %s486 = scalar_lea.sflag [#allocation5], %s485
        %s487 = sand.u32 %s54, 1
        %s488 = smul.addr %s487, 16
        %s489 = scalar_lea.vmem [#allocation4], %s488
        %p490 = pneg %p67
        %p491 = pneg %p64
        %s492 = sand.u32 %s32, 1
        %s493 = scalar_lea.sflag [#allocation8], %s492
        %s494 = sand.u32 %s80, 1
        %s495 = smul.addr %s494, 16
        %s496 = scalar_lea.vmem [#allocation7], %s495
        %p497 = pneg %p93
        %p498 = pneg %p90
        %s499 = sand.u32 %s32, 1
        %s500 = scalar_lea.sflag [#allocation8], %s499
        %s501 = sand.u32 %s106, 1
        %s502 = smul.addr %s501, 16
        %s503 = scalar_lea.vmem [#allocation9], %s502
        %p504 = pneg %p119
        %p505 = pneg %p116
        %p506 = pneg %p140
        %p507 = pneg %p137
        %p508 = pneg %p161
        %p509 = pneg %p158
        %p510 = pneg %p182
        %p511 = pneg %p179
        %p512 = pneg %p203
        %p513 = pneg %p200
        %p514 = pneg %p224
        %p515 = pneg %p221
        %p516 = pneg %p245
        %p517 = pneg %p242
        %p518 = pneg %p266
        %p519 = pneg %p263
        %p520 = pneg %p287
        %p521 = pneg %p284
        %p522 = pneg %p315
        %p523 = pneg %p312
        %s524 = sand.u32 %s302, 1
        %s525 = scalar_lea.sflag [#allocation6], %s524
        %s526 = sand.u32 %s302, 1
        %s527 = smul.addr %s526, 32
        %s528 = scalar_lea.vmem [#allocation13], %s527
        %s529 = smul.u32 2, %s36
        %s530 = smul.u32 2, %s36
        %s531 = smul.u32 2, %s36
        %s532 = smul.u32 2, %s36
        %p533 = scmp.eq.s32.totalorder %s37, 0
        // Predicated region
        $region85: #{tpu_custom_call.1} parent=63 // pred_check
          %p534 = pneg %p533
        $region86: #{tpu_custom_call.1} parent=63 // pred_check_branch
          %536 = sbr.rel (%p534) target = $region88
        $region87: #{tpu_custom_call.1} parent=63 // pred_region
          %v537 = vld [vmem:[%s463] sm:$0xff]
          %v538 = vld [vmem:[%s463 + $0x8] sm:$0xff]
          %539 = vst [vmem:[#allocation2] sm:$0xff] %v537
          %540 = vst [vmem:[#allocation2 + $0x8] sm:$0xff] %v538
          %v541 = vld [vmem:[%s472] sm:$0xff]
          %v542 = vld [vmem:[%s472 + $0x8] sm:$0xff]
          %543 = vst [vmem:[#allocation3] sm:$0xff] %v541
          %544 = vst [vmem:[#allocation3 + $0x8] sm:$0xff] %v542
        $region88: #{tpu_custom_call.1} parent=63 // pred_fallthru
          _
        %v545 = vld [vmem:[%s454] sm:$0xff]
        %v546 = vld [vmem:[%s454 + $0x8] sm:$0xff]
        %v547 = vld [vmem:[#allocation10] sm:$0xff]
        %v548 = vld [vmem:[#allocation10 + $0x8] sm:$0xff]
        %v549 = vld [vmem:[#allocation10 + $0x10] sm:$0xff]
        %v550 = vld [vmem:[#allocation10 + $0x18] sm:$0xff]
        %v551 = vld [vmem:[#allocation10 + $0x20] sm:$0xff]
        %v552 = vld [vmem:[#allocation10 + $0x28] sm:$0xff]
        %v553 = vld [vmem:[#allocation10 + $0x30] sm:$0xff]
        %v554 = vld [vmem:[#allocation10 + $0x38] sm:$0xff]
        %v555 = vld [vmem:[#allocation10 + $0x40] sm:$0xff]
        %v556 = vld [vmem:[#allocation10 + $0x48] sm:$0xff]
        %v557 = vld [vmem:[#allocation10 + $0x50] sm:$0xff]
        %v558 = vld [vmem:[#allocation10 + $0x58] sm:$0xff]
        %v559 = vld [vmem:[#allocation10 + $0x60] sm:$0xff]
        %v560 = vld [vmem:[#allocation10 + $0x68] sm:$0xff]
        %v561 = vld [vmem:[#allocation10 + $0x70] sm:$0xff]
        %v562 = vld [vmem:[#allocation10 + $0x78] sm:$0xff]
        %v563 = vld [vmem:[#allocation10 + $0x80] sm:$0xff]
        %v564 = vld [vmem:[#allocation10 + $0x88] sm:$0xff]
        %v565 = vld [vmem:[#allocation10 + $0x90] sm:$0xff]
        %v566 = vld [vmem:[#allocation10 + $0x98] sm:$0xff]
        %v567 = vld [vmem:[#allocation10 + $0xa0] sm:$0xff]
        %v568 = vld [vmem:[#allocation10 + $0xa8] sm:$0xff]
        %v569 = vld [vmem:[#allocation10 + $0xb0] sm:$0xff]
        %v570 = vld [vmem:[#allocation10 + $0xb8] sm:$0xff]
        %v571 = vld [vmem:[#allocation10 + $0xc0] sm:$0xff]
        %v572 = vld [vmem:[#allocation10 + $0xc8] sm:$0xff]
        %v573 = vld [vmem:[#allocation10 + $0xd0] sm:$0xff]
        %v574 = vld [vmem:[#allocation10 + $0xd8] sm:$0xff]
        %v575 = vld [vmem:[#allocation10 + $0xe0] sm:$0xff]
        %v576 = vld [vmem:[#allocation10 + $0xe8] sm:$0xff]
        %v577 = vld [vmem:[#allocation10 + $0xf0] sm:$0xff]
        %v578 = vld [vmem:[#allocation10 + $0xf8] sm:$0xff]
        %v579 = vld [vmem:[#allocation10 + $0x100] sm:$0xff]
        %v580 = vld [vmem:[#allocation10 + $0x108] sm:$0xff]
        %v581 = vld [vmem:[#allocation10 + $0x110] sm:$0xff]
        %v582 = vld [vmem:[#allocation10 + $0x118] sm:$0xff]
        %v583 = vld [vmem:[#allocation10 + $0x120] sm:$0xff]
        %v584 = vld [vmem:[#allocation10 + $0x128] sm:$0xff]
        %v585 = vld [vmem:[#allocation10 + $0x130] sm:$0xff]
        %v586 = vld [vmem:[#allocation10 + $0x138] sm:$0xff]
        %v587 = vld [vmem:[#allocation10 + $0x140] sm:$0xff]
        %v588 = vld [vmem:[#allocation10 + $0x148] sm:$0xff]
        %v589 = vld [vmem:[#allocation10 + $0x150] sm:$0xff]
        %v590 = vld [vmem:[#allocation10 + $0x158] sm:$0xff]
        %v591 = vld [vmem:[#allocation10 + $0x160] sm:$0xff]
        %v592 = vld [vmem:[#allocation10 + $0x168] sm:$0xff]
        %v593 = vld [vmem:[#allocation10 + $0x170] sm:$0xff]
        %v594 = vld [vmem:[#allocation10 + $0x178] sm:$0xff]
        %v595 = vld [vmem:[#allocation10 + $0x180] sm:$0xff]
        %v596 = vld [vmem:[#allocation10 + $0x188] sm:$0xff]
        %v597 = vld [vmem:[#allocation10 + $0x190] sm:$0xff]
        %v598 = vld [vmem:[#allocation10 + $0x198] sm:$0xff]
        %v599 = vld [vmem:[#allocation10 + $0x1a0] sm:$0xff]
        %v600 = vld [vmem:[#allocation10 + $0x1a8] sm:$0xff]
        %v601 = vld [vmem:[#allocation10 + $0x1b0] sm:$0xff]
        %v602 = vld [vmem:[#allocation10 + $0x1b8] sm:$0xff]
        %v603 = vld [vmem:[#allocation10 + $0x1c0] sm:$0xff]
        %v604 = vld [vmem:[#allocation10 + $0x1c8] sm:$0xff]
        %v605 = vld [vmem:[#allocation10 + $0x1d0] sm:$0xff]
        %v606 = vld [vmem:[#allocation10 + $0x1d8] sm:$0xff]
        %v607 = vld [vmem:[#allocation10 + $0x1e0] sm:$0xff]
        %v608 = vld [vmem:[#allocation10 + $0x1e8] sm:$0xff]
        %v609 = vld [vmem:[#allocation10 + $0x1f0] sm:$0xff]
        %v610 = vld [vmem:[#allocation10 + $0x1f8] sm:$0xff]
        %611 = vmatprep.subr.mxu0 %v548
        %612 = vmatpush1.msra.mxu0 %v547
        %613 = vmatprep.subr.mxu0 %v552
        %614 = vmatpush1.msra.mxu0 %v551
        %615 = vmatprep.subr.mxu0 %v556
        %616 = vmatpush1.msra.mxu0 %v555
        %617 = vmatprep.subr.mxu0 %v560
        %618 = vmatpush1.msra.mxu0 %v559
        %619 = vmatprep.subr.mxu0 %v564
        %620 = vmatpush1.msra.mxu0 %v563
        %621 = vmatprep.subr.mxu0 %v568
        %622 = vmatpush1.msra.mxu0 %v567
        %623 = vmatprep.subr.mxu0 %v572
        %624 = vmatpush1.msra.mxu0 %v571
        %625 = vmatprep.subr.mxu0 %v576
        %626 = vmatpush1.msra.mxu0 %v575
        %627 = vmatprep.subr.mxu0 %v580
        %628 = vmatpush1.msra.mxu0 %v579
        %629 = vmatprep.subr.mxu0 %v584
        %630 = vmatpush1.msra.mxu0 %v583
        %631 = vmatprep.subr.mxu0 %v588
        %632 = vmatpush1.msra.mxu0 %v587
        %633 = vmatprep.subr.mxu0 %v592
        %634 = vmatpush1.msra.mxu0 %v591
        %635 = vmatprep.subr.mxu0 %v596
        %636 = vmatpush1.msra.mxu0 %v595
        %637 = vmatprep.subr.mxu0 %v600
        %638 = vmatpush1.msra.mxu0 %v599
        %639 = vmatprep.subr.mxu0 %v604
        %640 = vmatpush1.msra.mxu0 %v603
        %641 = vmatprep.subr.mxu0 %v608
        %642 = vmatpush1.msra.mxu0 %v607
        %643 = vmatprep.subr.mxu0 0.0
        %644 = vmatpush1.msra.mxu0 0.0
        %645 = vmatprep.subr.mxu0 0.0
        %646 = vmatpush1.msra.mxu0 0.0
        %647 = vmatprep.subr.mxu0 0.0
        %648 = vmatpush1.msra.mxu0 0.0
        %649 = vmatprep.subr.mxu0 0.0
        %650 = vmatpush1.msra.mxu0 0.0
        %651 = vmatprep.subr.mxu0 0.0
        %652 = vmatpush1.msra.mxu0 0.0
        %653 = vmatprep.subr.mxu0 0.0
        %654 = vmatpush1.msra.mxu0 0.0
        %655 = vmatprep.subr.mxu0 0.0
        %656 = vmatpush1.msra.mxu0 0.0
        %657 = vmatprep.subr.mxu0 0.0
        %658 = vmatpush1.msra.mxu0 0.0
        %659 = vmatprep.subr.mxu0 0.0
        %660 = vmatpush1.msra.mxu0 0.0
        %661 = vmatprep.subr.mxu0 0.0
        %662 = vmatpush1.msra.mxu0 0.0
        %663 = vmatprep.subr.mxu0 0.0
        %664 = vmatpush1.msra.mxu0 0.0
        %665 = vmatprep.subr.mxu0 0.0
        %666 = vmatpush1.msra.mxu0 0.0
        %667 = vmatprep.subr.mxu0 0.0
        %668 = vmatpush1.msra.mxu0 0.0
        %669 = vmatprep.subr.mxu0 0.0
        %670 = vmatpush1.msra.mxu0 0.0
        %671 = vmatprep.subr.mxu0 0.0
        %672 = vmatpush1.msra.mxu0 0.0
        %673 = vmatprep.subr.mxu0 0.0
        %674 = vmatpush1.msra.mxu0 0.0
        %675 = vmatprep.mubr.f32.mxu0 0.0
        %676 = vmatmul.mubr.f32.gmra.mrb[0].mxu0 %v545
        %v677 = vpop.f32.mrb[0].mxu0
        %v678 = vadd.f32 0.0, %v677
        %v679 = vpop.f32.mrb[0].mxu0
        %v680 = vadd.f32 0.0, %v679
        %681 = vmatprep.mubr.f32.mxu0 0.0
        %682 = vmatmul.mubr.f32.gmra.mrb[0].mxu0 %v546
        %v683 = vpop.f32.mrb[0].mxu0
        %v684 = vadd.f32 0.0, %v683
        %v685 = vpop.f32.mrb[0].mxu0
        %v686 = vadd.f32 0.0, %v685
        %687 = vdwg.mxu0
        %688 = vmatprep.subr.mxu0 %v550
        %689 = vmatpush1.msra.mxu0 %v549
        %690 = vmatprep.subr.mxu0 %v554
        %691 = vmatpush1.msra.mxu0 %v553
        %692 = vmatprep.subr.mxu0 %v558
        %693 = vmatpush1.msra.mxu0 %v557
        %694 = vmatprep.subr.mxu0 %v562
        %695 = vmatpush1.msra.mxu0 %v561
        %696 = vmatprep.subr.mxu0 %v566
        %697 = vmatpush1.msra.mxu0 %v565
        %698 = vmatprep.subr.mxu0 %v570
        %699 = vmatpush1.msra.mxu0 %v569
        %700 = vmatprep.subr.mxu0 %v574
        %701 = vmatpush1.msra.mxu0 %v573
        %702 = vmatprep.subr.mxu0 %v578
        %703 = vmatpush1.msra.mxu0 %v577
        %704 = vmatprep.subr.mxu0 %v582
        %705 = vmatpush1.msra.mxu0 %v581
        %706 = vmatprep.subr.mxu0 %v586
        %707 = vmatpush1.msra.mxu0 %v585
        %708 = vmatprep.subr.mxu0 %v590
        %709 = vmatpush1.msra.mxu0 %v589
        %710 = vmatprep.subr.mxu0 %v594
        %711 = vmatpush1.msra.mxu0 %v593
        %712 = vmatprep.subr.mxu0 %v598
        %713 = vmatpush1.msra.mxu0 %v597
        %714 = vmatprep.subr.mxu0 %v602
        %715 = vmatpush1.msra.mxu0 %v601
        %716 = vmatprep.subr.mxu0 %v606
        %717 = vmatpush1.msra.mxu0 %v605
        %718 = vmatprep.subr.mxu0 %v610
        %719 = vmatpush1.msra.mxu0 %v609
        %720 = vmatprep.subr.mxu0 0.0
        %721 = vmatpush1.msra.mxu0 0.0
        %722 = vmatprep.subr.mxu0 0.0
        %723 = vmatpush1.msra.mxu0 0.0
        %724 = vmatprep.subr.mxu0 0.0
        %725 = vmatpush1.msra.mxu0 0.0
        %726 = vmatprep.subr.mxu0 0.0
        %727 = vmatpush1.msra.mxu0 0.0
        %728 = vmatprep.subr.mxu0 0.0
        %729 = vmatpush1.msra.mxu0 0.0
        %730 = vmatprep.subr.mxu0 0.0
        %731 = vmatpush1.msra.mxu0 0.0
        %732 = vmatprep.subr.mxu0 0.0
        %733 = vmatpush1.msra.mxu0 0.0
        %734 = vmatprep.subr.mxu0 0.0
        %735 = vmatpush1.msra.mxu0 0.0
        %736 = vmatprep.subr.mxu0 0.0
        %737 = vmatpush1.msra.mxu0 0.0
        %738 = vmatprep.subr.mxu0 0.0
        %739 = vmatpush1.msra.mxu0 0.0
        %740 = vmatprep.subr.mxu0 0.0
        %741 = vmatpush1.msra.mxu0 0.0
        %742 = vmatprep.subr.mxu0 0.0
        %743 = vmatpush1.msra.mxu0 0.0
        %744 = vmatprep.subr.mxu0 0.0
        %745 = vmatpush1.msra.mxu0 0.0
        %746 = vmatprep.subr.mxu0 0.0
        %747 = vmatpush1.msra.mxu0 0.0
        %748 = vmatprep.subr.mxu0 0.0
        %749 = vmatpush1.msra.mxu0 0.0
        %750 = vmatprep.subr.mxu0 0.0
        %751 = vmatpush1.msra.mxu0 0.0
        %752 = vmatprep.mubr.f32.mxu0 0.0
        %753 = vmatmul.mubr.f32.gmra.mrb[0].mxu0 %v545
        %v754 = vpop.f32.mrb[0].mxu0
        %v755 = vadd.f32 0.0, %v754
        %v756 = vpop.f32.mrb[0].mxu0
        %v757 = vadd.f32 0.0, %v756
        %758 = vmatprep.mubr.f32.mxu0 0.0
        %759 = vmatmul.mubr.f32.gmra.mrb[0].mxu0 %v546
        %v760 = vpop.f32.mrb[0].mxu0
        %v761 = vadd.f32 0.0, %v760
        %v762 = vpop.f32.mrb[0].mxu0
        %v763 = vadd.f32 0.0, %v762
        %764 = vdwg.mxu0
        %v765 = vld [vmem:[#allocation2] sm:$0xff]
        %v766 = vld [vmem:[#allocation2 + $0x8] sm:$0xff]
        %v767 = vld [vmem:[#allocation12] sm:$0xff]
        %v768 = vld [vmem:[#allocation12 + $0x8] sm:$0xff]
        %v769 = vld [vmem:[#allocation12 + $0x10] sm:$0xff]
        %v770 = vld [vmem:[#allocation12 + $0x18] sm:$0xff]
        %v771 = vld [vmem:[#allocation12 + $0x20] sm:$0xff]
        %v772 = vld [vmem:[#allocation12 + $0x28] sm:$0xff]
        %v773 = vld [vmem:[#allocation12 + $0x30] sm:$0xff]
        %v774 = vld [vmem:[#allocation12 + $0x38] sm:$0xff]
        %v775 = vld [vmem:[#allocation12 + $0x40] sm:$0xff]
        %v776 = vld [vmem:[#allocation12 + $0x48] sm:$0xff]
        %v777 = vld [vmem:[#allocation12 + $0x50] sm:$0xff]
        %v778 = vld [vmem:[#allocation12 + $0x58] sm:$0xff]
        %v779 = vld [vmem:[#allocation12 + $0x60] sm:$0xff]
        %v780 = vld [vmem:[#allocation12 + $0x68] sm:$0xff]
        %v781 = vld [vmem:[#allocation12 + $0x70] sm:$0xff]
        %v782 = vld [vmem:[#allocation12 + $0x78] sm:$0xff]
        %v783 = vld [vmem:[#allocation12 + $0x80] sm:$0xff]
        %v784 = vld [vmem:[#allocation12 + $0x88] sm:$0xff]
        %v785 = vld [vmem:[#allocation12 + $0x90] sm:$0xff]
        %v786 = vld [vmem:[#allocation12 + $0x98] sm:$0xff]
        %v787 = vld [vmem:[#allocation12 + $0xa0] sm:$0xff]
        %v788 = vld [vmem:[#allocation12 + $0xa8] sm:$0xff]
        %v789 = vld [vmem:[#allocation12 + $0xb0] sm:$0xff]
        %v790 = vld [vmem:[#allocation12 + $0xb8] sm:$0xff]
        %v791 = vld [vmem:[#allocation12 + $0xc0] sm:$0xff]
        %v792 = vld [vmem:[#allocation12 + $0xc8] sm:$0xff]
        %v793 = vld [vmem:[#allocation12 + $0xd0] sm:$0xff]
        %v794 = vld [vmem:[#allocation12 + $0xd8] sm:$0xff]
        %v795 = vld [vmem:[#allocation12 + $0xe0] sm:$0xff]
        %v796 = vld [vmem:[#allocation12 + $0xe8] sm:$0xff]
        %v797 = vld [vmem:[#allocation12 + $0xf0] sm:$0xff]
        %v798 = vld [vmem:[#allocation12 + $0xf8] sm:$0xff]
        %v799 = vld [vmem:[#allocation12 + $0x100] sm:$0xff]
        %v800 = vld [vmem:[#allocation12 + $0x108] sm:$0xff]
        %v801 = vld [vmem:[#allocation12 + $0x110] sm:$0xff]
        %v802 = vld [vmem:[#allocation12 + $0x118] sm:$0xff]
        %v803 = vld [vmem:[#allocation12 + $0x120] sm:$0xff]
        %v804 = vld [vmem:[#allocation12 + $0x128] sm:$0xff]
        %v805 = vld [vmem:[#allocation12 + $0x130] sm:$0xff]
        %v806 = vld [vmem:[#allocation12 + $0x138] sm:$0xff]
        %v807 = vld [vmem:[#allocation12 + $0x140] sm:$0xff]
        %v808 = vld [vmem:[#allocation12 + $0x148] sm:$0xff]
        %v809 = vld [vmem:[#allocation12 + $0x150] sm:$0xff]
        %v810 = vld [vmem:[#allocation12 + $0x158] sm:$0xff]
        %v811 = vld [vmem:[#allocation12 + $0x160] sm:$0xff]
        %v812 = vld [vmem:[#allocation12 + $0x168] sm:$0xff]
        %v813 = vld [vmem:[#allocation12 + $0x170] sm:$0xff]
        %v814 = vld [vmem:[#allocation12 + $0x178] sm:$0xff]
        %v815 = vld [vmem:[#allocation12 + $0x180] sm:$0xff]
        %v816 = vld [vmem:[#allocation12 + $0x188] sm:$0xff]
        %v817 = vld [vmem:[#allocation12 + $0x190] sm:$0xff]
        %v818 = vld [vmem:[#allocation12 + $0x198] sm:$0xff]
        %v819 = vld [vmem:[#allocation12 + $0x1a0] sm:$0xff]
        %v820 = vld [vmem:[#allocation12 + $0x1a8] sm:$0xff]
        %v821 = vld [vmem:[#allocation12 + $0x1b0] sm:$0xff]
        %v822 = vld [vmem:[#allocation12 + $0x1b8] sm:$0xff]
        %v823 = vld [vmem:[#allocation12 + $0x1c0] sm:$0xff]
        %v824 = vld [vmem:[#allocation12 + $0x1c8] sm:$0xff]
        %v825 = vld [vmem:[#allocation12 + $0x1d0] sm:$0xff]
        %v826 = vld [vmem:[#allocation12 + $0x1d8] sm:$0xff]
        %v827 = vld [vmem:[#allocation12 + $0x1e0] sm:$0xff]
        %v828 = vld [vmem:[#allocation12 + $0x1e8] sm:$0xff]
        %v829 = vld [vmem:[#allocation12 + $0x1f0] sm:$0xff]
        %v830 = vld [vmem:[#allocation12 + $0x1f8] sm:$0xff]
        %831 = vmatprep.subr.mxu0 %v768
        %832 = vmatpush1.msra.mxu0 %v767
        %833 = vmatprep.subr.mxu0 %v772
        %834 = vmatpush1.msra.mxu0 %v771
        %835 = vmatprep.subr.mxu0 %v776
        %836 = vmatpush1.msra.mxu0 %v775
        %837 = vmatprep.subr.mxu0 %v780
        %838 = vmatpush1.msra.mxu0 %v779
        %839 = vmatprep.subr.mxu0 %v784
        %840 = vmatpush1.msra.mxu0 %v783
        %841 = vmatprep.subr.mxu0 %v788
        %842 = vmatpush1.msra.mxu0 %v787
        %843 = vmatprep.subr.mxu0 %v792
        %844 = vmatpush1.msra.mxu0 %v791
        %845 = vmatprep.subr.mxu0 %v796
        %846 = vmatpush1.msra.mxu0 %v795
        %847 = vmatprep.subr.mxu0 %v800
        %848 = vmatpush1.msra.mxu0 %v799
        %849 = vmatprep.subr.mxu0 %v804
        %850 = vmatpush1.msra.mxu0 %v803
        %851 = vmatprep.subr.mxu0 %v808
        %852 = vmatpush1.msra.mxu0 %v807
        %853 = vmatprep.subr.mxu0 %v812
        %854 = vmatpush1.msra.mxu0 %v811
        %855 = vmatprep.subr.mxu0 %v816
        %856 = vmatpush1.msra.mxu0 %v815
        %857 = vmatprep.subr.mxu0 %v820
        %858 = vmatpush1.msra.mxu0 %v819
        %859 = vmatprep.subr.mxu0 %v824
        %860 = vmatpush1.msra.mxu0 %v823
        %861 = vmatprep.subr.mxu0 %v828
        %862 = vmatpush1.msra.mxu0 %v827
        %863 = vmatprep.subr.mxu0 0.0
        %864 = vmatpush1.msra.mxu0 0.0
        %865 = vmatprep.subr.mxu0 0.0
        %866 = vmatpush1.msra.mxu0 0.0
        %867 = vmatprep.subr.mxu0 0.0
        %868 = vmatpush1.msra.mxu0 0.0
        %869 = vmatprep.subr.mxu0 0.0
        %870 = vmatpush1.msra.mxu0 0.0
        %871 = vmatprep.subr.mxu0 0.0
        %872 = vmatpush1.msra.mxu0 0.0
        %873 = vmatprep.subr.mxu0 0.0
        %874 = vmatpush1.msra.mxu0 0.0
        %875 = vmatprep.subr.mxu0 0.0
        %876 = vmatpush1.msra.mxu0 0.0
        %877 = vmatprep.subr.mxu0 0.0
        %878 = vmatpush1.msra.mxu0 0.0
        %879 = vmatprep.subr.mxu0 0.0
        %880 = vmatpush1.msra.mxu0 0.0
        %881 = vmatprep.subr.mxu0 0.0
        %882 = vmatpush1.msra.mxu0 0.0
        %883 = vmatprep.subr.mxu0 0.0
        %884 = vmatpush1.msra.mxu0 0.0
        %885 = vmatprep.subr.mxu0 0.0
        %886 = vmatpush1.msra.mxu0 0.0
        %887 = vmatprep.subr.mxu0 0.0
        %888 = vmatpush1.msra.mxu0 0.0
        %889 = vmatprep.subr.mxu0 0.0
        %890 = vmatpush1.msra.mxu0 0.0
        %891 = vmatprep.subr.mxu0 0.0
        %892 = vmatpush1.msra.mxu0 0.0
        %893 = vmatprep.subr.mxu0 0.0
        %894 = vmatpush1.msra.mxu0 0.0
        %895 = vmatprep.mubr.f32.mxu0 0.0
        %896 = vmatmul.mubr.f32.gmra.mrb[0].mxu0 %v765
        %v897 = vpop.f32.mrb[0].mxu0
        %v898 = vadd.f32 0.0, %v897
        %v899 = vpop.f32.mrb[0].mxu0
        %v900 = vadd.f32 0.0, %v899
        %901 = vmatprep.mubr.f32.mxu0 0.0
        %902 = vmatmul.mubr.f32.gmra.mrb[0].mxu0 %v766
        %v903 = vpop.f32.mrb[0].mxu0
        %v904 = vadd.f32 0.0, %v903
        %v905 = vpop.f32.mrb[0].mxu0
        %v906 = vadd.f32 0.0, %v905
        %907 = vdwg.mxu0
        %908 = vmatprep.subr.mxu0 %v770
        %909 = vmatpush1.msra.mxu0 %v769
        %910 = vmatprep.subr.mxu0 %v774
        %911 = vmatpush1.msra.mxu0 %v773
        %912 = vmatprep.subr.mxu0 %v778
        %913 = vmatpush1.msra.mxu0 %v777
        %914 = vmatprep.subr.mxu0 %v782
        %915 = vmatpush1.msra.mxu0 %v781
        %916 = vmatprep.subr.mxu0 %v786
        %917 = vmatpush1.msra.mxu0 %v785
        %918 = vmatprep.subr.mxu0 %v790
        %919 = vmatpush1.msra.mxu0 %v789
        %920 = vmatprep.subr.mxu0 %v794
        %921 = vmatpush1.msra.mxu0 %v793
        %922 = vmatprep.subr.mxu0 %v798
        %923 = vmatpush1.msra.mxu0 %v797
        %924 = vmatprep.subr.mxu0 %v802
        %925 = vmatpush1.msra.mxu0 %v801
        %926 = vmatprep.subr.mxu0 %v806
        %927 = vmatpush1.msra.mxu0 %v805
        %928 = vmatprep.subr.mxu0 %v810
        %929 = vmatpush1.msra.mxu0 %v809
        %930 = vmatprep.subr.mxu0 %v814
        %931 = vmatpush1.msra.mxu0 %v813
        %932 = vmatprep.subr.mxu0 %v818
        %933 = vmatpush1.msra.mxu0 %v817
        %934 = vmatprep.subr.mxu0 %v822
        %935 = vmatpush1.msra.mxu0 %v821
        %936 = vmatprep.subr.mxu0 %v826
        %937 = vmatpush1.msra.mxu0 %v825
        %938 = vmatprep.subr.mxu0 %v830
        %939 = vmatpush1.msra.mxu0 %v829
        %940 = vmatprep.subr.mxu0 0.0
        %941 = vmatpush1.msra.mxu0 0.0
        %942 = vmatprep.subr.mxu0 0.0
        %943 = vmatpush1.msra.mxu0 0.0
        %944 = vmatprep.subr.mxu0 0.0
        %945 = vmatpush1.msra.mxu0 0.0
        %946 = vmatprep.subr.mxu0 0.0
        %947 = vmatpush1.msra.mxu0 0.0
        %948 = vmatprep.subr.mxu0 0.0
        %949 = vmatpush1.msra.mxu0 0.0
        %950 = vmatprep.subr.mxu0 0.0
        %951 = vmatpush1.msra.mxu0 0.0
        %952 = vmatprep.subr.mxu0 0.0
        %953 = vmatpush1.msra.mxu0 0.0
        %954 = vmatprep.subr.mxu0 0.0
        %955 = vmatpush1.msra.mxu0 0.0
        %956 = vmatprep.subr.mxu0 0.0
        %957 = vmatpush1.msra.mxu0 0.0
        %958 = vmatprep.subr.mxu0 0.0
        %959 = vmatpush1.msra.mxu0 0.0
        %960 = vmatprep.subr.mxu0 0.0
        %961 = vmatpush1.msra.mxu0 0.0
        %962 = vmatprep.subr.mxu0 0.0
        %963 = vmatpush1.msra.mxu0 0.0
        %964 = vmatprep.subr.mxu0 0.0
        %965 = vmatpush1.msra.mxu0 0.0
        %966 = vmatprep.subr.mxu0 0.0
        %967 = vmatpush1.msra.mxu0 0.0
        %968 = vmatprep.subr.mxu0 0.0
        %969 = vmatpush1.msra.mxu0 0.0
        %970 = vmatprep.subr.mxu0 0.0
        %971 = vmatpush1.msra.mxu0 0.0
        %972 = vmatprep.mubr.f32.mxu0 0.0
        %973 = vmatmul.mubr.f32.gmra.mrb[0].mxu0 %v765
        %v974 = vpop.f32.mrb[0].mxu0
        %v975 = vadd.f32 0.0, %v974
        %v976 = vpop.f32.mrb[0].mxu0
        %v977 = vadd.f32 0.0, %v976
        %978 = vmatprep.mubr.f32.mxu0 0.0
        %979 = vmatmul.mubr.f32.gmra.mrb[0].mxu0 %v766
        %v980 = vpop.f32.mrb[0].mxu0
        %v981 = vadd.f32 0.0, %v980
        %v982 = vpop.f32.mrb[0].mxu0
        %v983 = vadd.f32 0.0, %v982
        %984 = vdwg.mxu0
        %v985 = vld [vmem:[%s5] sm:$0xf]
        %v986 = vld [vmem:[%s6] sm:$0xf]
        %v987 = vadd.f32 %v678, %v680
        %v988 = vadd.f32 %v987, %v755
        %v989 = vadd.f32 %v988, %v757
        %990 = vadd.xlane.f32.xlu0 %v989
        %v991 = vpop.xlane.xlu0 %990
        %v992 = vadd.f32 %v684, %v686
        %v993 = vadd.f32 %v992, %v761
        %v994 = vadd.f32 %v993, %v763
        %995 = vadd.xlane.f32.xlu0 %v994
        %v996 = vpop.xlane.xlu0 %995
        %v997 = vrcp.pop 512.0
        %v998 = vmul.f32 %v991, %v997
        %v999 = vmul.f32 %v996, %v997
        %v1000 = vmul.f32 %v678, %v678
        %v1001 = vmul.f32 %v680, %v680
        %v1002 = vmul.f32 %v755, %v755
        %v1003 = vmul.f32 %v757, %v757
        %v1004 = vmul.f32 %v684, %v684
        %v1005 = vmul.f32 %v686, %v686
        %v1006 = vmul.f32 %v761, %v761
        %v1007 = vmul.f32 %v763, %v763
        %v1008 = vadd.f32 %v1000, %v1001
        %v1009 = vadd.f32 %v1008, %v1002
        %v1010 = vadd.f32 %v1009, %v1003
        %1011 = vadd.xlane.f32.xlu0 %v1010
        %v1012 = vpop.xlane.xlu0 %1011
        %v1013 = vadd.f32 %v1004, %v1005
        %v1014 = vadd.f32 %v1013, %v1006
        %v1015 = vadd.f32 %v1014, %v1007
        %1016 = vadd.xlane.f32.xlu0 %v1015
        %v1017 = vpop.xlane.xlu0 %1016
        %v1018 = vmul.f32 %v1012, %v997
        %v1019 = vmul.f32 %v1017, %v997
        %v1020 = vmul.f32 %v998, %v998
        %v1021 = vmul.f32 %v999, %v999
        %v1022 = vsub.f32 %v1018, %v1020
        %v1023 = vsub.f32 %v1019, %v1021
        %v1024 = vmax.f32 %v1022, 0.0
        %v1025 = vmax.f32 %v1023, 0.0
        %v1026 = vsub.f32 %v678, %v998
        %v1027 = vsub.f32 %v680, %v998
        %v1028 = vsub.f32 %v755, %v998
        %v1029 = vsub.f32 %v757, %v998
        %v1030 = vsub.f32 %v684, %v999
        %v1031 = vsub.f32 %v686, %v999
        %v1032 = vsub.f32 %v761, %v999
        %v1033 = vsub.f32 %v763, %v999
        %v1034 = vadd.f32 %v1024, 1e-05
        %v1035 = vadd.f32 %v1025, 1e-05
        %v1036 = vrsqrt.pop %v1034
        %v1037 = vrsqrt.pop %v1035
        %v1038 = vmul.f32 %v1026, %v1036
        %v1039 = vmul.f32 %v1027, %v1036
        %v1040 = vmul.f32 %v1028, %v1036
        %v1041 = vmul.f32 %v1029, %v1036
        %v1042 = vmul.f32 %v1030, %v1037
        %v1043 = vmul.f32 %v1031, %v1037
        %v1044 = vmul.f32 %v1032, %v1037
        %v1045 = vmul.f32 %v1033, %v1037
        %v1047 = vlaneseq
        %v1048 = vshrl.u32 %v1047, 7
        %v1049 = vsub.s32 0, %v1048
        %v1050 = vrot.slane %v985, %v1049
        %v1051 = vlaneseq
        %v1052 = vshrl.u32 %v1051, 7
        %v1053 = vsub.s32 1, %v1052
        %v1054 = vrot.slane %v985, %v1053
        %v1055 = vlaneseq
        %v1056 = vshrl.u32 %v1055, 7
        %v1057 = vsub.s32 2, %v1056
        %v1058 = vrot.slane %v985, %v1057
        %v1059 = vlaneseq
        %v1060 = vshrl.u32 %v1059, 7
        %v1061 = vsub.s32 3, %v1060
        %v1062 = vrot.slane %v985, %v1061
        %v1067 = vmul.f32 %v1038, %v1050
        %v1068 = vmul.f32 %v1039, %v1054
        %v1069 = vmul.f32 %v1040, %v1058
        %v1070 = vmul.f32 %v1041, %v1062
        %v1071 = vmul.f32 %v1042, %v1050
        %v1072 = vmul.f32 %v1043, %v1054
        %v1073 = vmul.f32 %v1044, %v1058
        %v1074 = vmul.f32 %v1045, %v1062
        %v1076 = vlaneseq
        %v1077 = vshrl.u32 %v1076, 7
        %v1078 = vsub.s32 0, %v1077
        %v1079 = vrot.slane %v986, %v1078
        %v1080 = vlaneseq
        %v1081 = vshrl.u32 %v1080, 7
        %v1082 = vsub.s32 1, %v1081
        %v1083 = vrot.slane %v986, %v1082
        %v1084 = vlaneseq
        %v1085 = vshrl.u32 %v1084, 7
        %v1086 = vsub.s32 2, %v1085
        %v1087 = vrot.slane %v986, %v1086
        %v1088 = vlaneseq
        %v1089 = vshrl.u32 %v1088, 7
        %v1090 = vsub.s32 3, %v1089
        %v1091 = vrot.slane %v986, %v1090
        %v1096 = vadd.f32 %v1067, %v1079
        %v1097 = vadd.f32 %v1068, %v1083
        %v1098 = vadd.f32 %v1069, %v1087
        %v1099 = vadd.f32 %v1070, %v1091
        %v1100 = vadd.f32 %v1071, %v1079
        %v1101 = vadd.f32 %v1072, %v1083
        %v1102 = vadd.f32 %v1073, %v1087
        %v1103 = vadd.f32 %v1074, %v1091
        %v1104 = vld [vmem:[%s7] sm:$0xf]
        %v1105 = vld [vmem:[%s8] sm:$0xf]
        %v1106 = vadd.f32 %v898, %v900
        %v1107 = vadd.f32 %v1106, %v975
        %v1108 = vadd.f32 %v1107, %v977
        %1109 = vadd.xlane.f32.xlu0 %v1108
        %v1110 = vpop.xlane.xlu0 %1109
        %v1111 = vadd.f32 %v904, %v906
        %v1112 = vadd.f32 %v1111, %v981
        %v1113 = vadd.f32 %v1112, %v983
        %1114 = vadd.xlane.f32.xlu0 %v1113
        %v1115 = vpop.xlane.xlu0 %1114
        %v1116 = vmul.f32 %v1110, %v997
        %v1117 = vmul.f32 %v1115, %v997
        %v1118 = vmul.f32 %v898, %v898
        %v1119 = vmul.f32 %v900, %v900
        %v1120 = vmul.f32 %v975, %v975
        %v1121 = vmul.f32 %v977, %v977
        %v1122 = vmul.f32 %v904, %v904
        %v1123 = vmul.f32 %v906, %v906
        %v1124 = vmul.f32 %v981, %v981
        %v1125 = vmul.f32 %v983, %v983
        %v1126 = vadd.f32 %v1118, %v1119
        %v1127 = vadd.f32 %v1126, %v1120
        %v1128 = vadd.f32 %v1127, %v1121
        %1129 = vadd.xlane.f32.xlu0 %v1128
        %v1130 = vpop.xlane.xlu0 %1129
        %v1131 = vadd.f32 %v1122, %v1123
        %v1132 = vadd.f32 %v1131, %v1124
        %v1133 = vadd.f32 %v1132, %v1125
        %1134 = vadd.xlane.f32.xlu0 %v1133
        %v1135 = vpop.xlane.xlu0 %1134
        %v1136 = vmul.f32 %v1130, %v997
        %v1137 = vmul.f32 %v1135, %v997
        %v1138 = vmul.f32 %v1116, %v1116
        %v1139 = vmul.f32 %v1117, %v1117
        %v1140 = vsub.f32 %v1136, %v1138
        %v1141 = vsub.f32 %v1137, %v1139
        %v1142 = vmax.f32 %v1140, 0.0
        %v1143 = vmax.f32 %v1141, 0.0
        %v1144 = vsub.f32 %v898, %v1116
        %v1145 = vsub.f32 %v900, %v1116
        %v1146 = vsub.f32 %v975, %v1116
        %v1147 = vsub.f32 %v977, %v1116
        %v1148 = vsub.f32 %v904, %v1117
        %v1149 = vsub.f32 %v906, %v1117
        %v1150 = vsub.f32 %v981, %v1117
        %v1151 = vsub.f32 %v983, %v1117
        %v1152 = vadd.f32 %v1142, 1e-05
        %v1153 = vadd.f32 %v1143, 1e-05
        %v1154 = vrsqrt.pop %v1152
        %v1155 = vrsqrt.pop %v1153
        %v1156 = vmul.f32 %v1144, %v1154
        %v1157 = vmul.f32 %v1145, %v1154
        %v1158 = vmul.f32 %v1146, %v1154
        %v1159 = vmul.f32 %v1147, %v1154
        %v1160 = vmul.f32 %v1148, %v1155
        %v1161 = vmul.f32 %v1149, %v1155
        %v1162 = vmul.f32 %v1150, %v1155
        %v1163 = vmul.f32 %v1151, %v1155
        %v1165 = vlaneseq
        %v1166 = vshrl.u32 %v1165, 7
        %v1167 = vsub.s32 0, %v1166
        %v1168 = vrot.slane %v1104, %v1167
        %v1169 = vlaneseq
        %v1170 = vshrl.u32 %v1169, 7
        %v1171 = vsub.s32 1, %v1170
        %v1172 = vrot.slane %v1104, %v1171
        %v1173 = vlaneseq
        %v1174 = vshrl.u32 %v1173, 7
        %v1175 = vsub.s32 2, %v1174
        %v1176 = vrot.slane %v1104, %v1175
        %v1177 = vlaneseq
        %v1178 = vshrl.u32 %v1177, 7
        %v1179 = vsub.s32 3, %v1178
        %v1180 = vrot.slane %v1104, %v1179
        %v1185 = vmul.f32 %v1156, %v1168
        %v1186 = vmul.f32 %v1157, %v1172
        %v1187 = vmul.f32 %v1158, %v1176
        %v1188 = vmul.f32 %v1159, %v1180
        %v1189 = vmul.f32 %v1160, %v1168
        %v1190 = vmul.f32 %v1161, %v1172
        %v1191 = vmul.f32 %v1162, %v1176
        %v1192 = vmul.f32 %v1163, %v1180
        %v1194 = vlaneseq
        %v1195 = vshrl.u32 %v1194, 7
        %v1196 = vsub.s32 0, %v1195
        %v1197 = vrot.slane %v1105, %v1196
        %v1198 = vlaneseq
        %v1199 = vshrl.u32 %v1198, 7
        %v1200 = vsub.s32 1, %v1199
        %v1201 = vrot.slane %v1105, %v1200
        %v1202 = vlaneseq
        %v1203 = vshrl.u32 %v1202, 7
        %v1204 = vsub.s32 2, %v1203
        %v1205 = vrot.slane %v1105, %v1204
        %v1206 = vlaneseq
        %v1207 = vshrl.u32 %v1206, 7
        %v1208 = vsub.s32 3, %v1207
        %v1209 = vrot.slane %v1105, %v1208
        %v1214 = vadd.f32 %v1185, %v1197
        %v1215 = vadd.f32 %v1186, %v1201
        %v1216 = vadd.f32 %v1187, %v1205
        %v1217 = vadd.f32 %v1188, %v1209
        %v1218 = vadd.f32 %v1189, %v1197
        %v1219 = vadd.f32 %v1190, %v1201
        %v1220 = vadd.f32 %v1191, %v1205
        %v1221 = vadd.f32 %v1192, %v1209
        %v1222 = vadd.f32 %v1096, %v1214
        %v1223 = vadd.f32 %v1097, %v1215
        %v1224 = vadd.f32 %v1098, %v1216
        %v1225 = vadd.f32 %v1099, %v1217
        %v1226 = vadd.f32 %v1100, %v1218
        %v1227 = vadd.f32 %v1101, %v1219
        %v1228 = vadd.f32 %v1102, %v1220
        %v1229 = vadd.f32 %v1103, %v1221
        %v1230 = vmul.f32 %v1222, 0.5
        %v1231 = vmul.f32 %v1223, 0.5
        %v1232 = vmul.f32 %v1224, 0.5
        %v1233 = vmul.f32 %v1226, 0.5
        %v1234 = vmul.f32 %v1227, 0.5
        %v1235 = vmul.f32 %v1228, 0.5
        %v1236 = vtanh.pop %v1230
        %v1237 = vtanh.pop %v1231
        %v1238 = vtanh.pop %v1232
        %v1239 = vtanh.pop %v1233
        %v1240 = vtanh.pop %v1234
        %v1241 = vtanh.pop %v1235
        %v1242 = vadd.f32 %v1236, 1.0
        %v1243 = vadd.f32 %v1237, 1.0
        %v1244 = vadd.f32 %v1238, 1.0
        %v1245 = vadd.f32 %v1239, 1.0
        %v1246 = vadd.f32 %v1240, 1.0
        %v1247 = vadd.f32 %v1241, 1.0
        %v1248 = vmul.f32 %v1242, 0.5
        %v1249 = vmul.f32 %v1243, 0.5
        %v1250 = vmul.f32 %v1244, 0.5
        %v1251 = vmul.f32 %v1245, 0.5
        %v1252 = vmul.f32 %v1246, 0.5
        %v1253 = vmul.f32 %v1247, 0.5
        %v1254 = vtanh.pop %v1225
        %v1255 = vtanh.pop %v1229
        %v1256 = vld [vmem:[#allocation3] sm:$0xff]
        %v1257 = vld [vmem:[#allocation3 + $0x8] sm:$0xff]
        %v1258 = vmul.f32 %v1249, %v1256
        %v1259 = vmul.f32 %v1252, %v1257
        %v1260 = vmul.f32 %v1248, %v1254
        %v1261 = vmul.f32 %v1251, %v1255
        %v1262 = vadd.f32 %v1258, %v1260
        %v1263 = vadd.f32 %v1259, %v1261
        %v1264 = vld [vmem:[%s9] sm:$0x1]
        %v1265 = vld [vmem:[%s10] sm:$0x1]
        %1266 = vadd.xlane.f32.xlu0 %v1262
        %v1267 = vpop.xlane.xlu0 %1266
        %1268 = vadd.xlane.f32.xlu0 %v1263
        %v1269 = vpop.xlane.xlu0 %1268
        %v1270 = vrcp.pop 128.0
        %v1271 = vmul.f32 %v1267, %v1270
        %v1272 = vmul.f32 %v1269, %v1270
        %v1273 = vmul.f32 %v1262, %v1262
        %v1274 = vmul.f32 %v1263, %v1263
        %1275 = vadd.xlane.f32.xlu0 %v1273
        %v1276 = vpop.xlane.xlu0 %1275
        %1277 = vadd.xlane.f32.xlu0 %v1274
        %v1278 = vpop.xlane.xlu0 %1277
        %v1279 = vmul.f32 %v1276, %v1270
        %v1280 = vmul.f32 %v1278, %v1270
        %v1281 = vmul.f32 %v1271, %v1271
        %v1282 = vmul.f32 %v1272, %v1272
        %v1283 = vsub.f32 %v1279, %v1281
        %v1284 = vsub.f32 %v1280, %v1282
        %v1285 = vmax.f32 %v1283, 0.0
        %v1286 = vmax.f32 %v1284, 0.0
        %v1287 = vsub.f32 %v1262, %v1271
        %v1288 = vsub.f32 %v1263, %v1272
        %v1289 = vadd.f32 %v1285, 1e-05
        %v1290 = vadd.f32 %v1286, 1e-05
        %v1291 = vrsqrt.pop %v1289
        %v1292 = vrsqrt.pop %v1290
        %v1293 = vmul.f32 %v1287, %v1291
        %v1294 = vmul.f32 %v1288, %v1292
        %v1296 = vlaneseq
        %v1297 = vshrl.u32 %v1296, 7
        %v1298 = vsub.s32 0, %v1297
        %v1299 = vrot.slane %v1264, %v1298
        %v1301 = vmul.f32 %v1293, %v1299
        %v1302 = vmul.f32 %v1294, %v1299
        %v1304 = vlaneseq
        %v1305 = vshrl.u32 %v1304, 7
        %v1306 = vsub.s32 0, %v1305
        %v1307 = vrot.slane %v1265, %v1306
        %v1309 = vadd.f32 %v1301, %v1307
        %v1310 = vadd.f32 %v1302, %v1307
        %v1311 = vtanh.pop %v1309
        %v1312 = vtanh.pop %v1310
        %v1313 = vmul.f32 %v1250, %v1311
        %v1314 = vmul.f32 %v1253, %v1312
        %1315 = vst [vmem:[#allocation2] sm:$0xff] %v1313
        %1316 = vst [vmem:[#allocation2 + $0x8] sm:$0xff] %v1314
        %1317 = vst [vmem:[#allocation3] sm:$0xff] %v1309
        %1318 = vst [vmem:[#allocation3 + $0x8] sm:$0xff] %v1310
        %1319 = vst [vmem:[%s528] sm:$0xff] %v1313
        %1320 = vst [vmem:[%s528 + $0x8] sm:$0xff] %v1309
        %1321 = vst [vmem:[%s528 + $0x10] sm:$0xff] %v1314
        %1322 = vst [vmem:[%s528 + $0x18] sm:$0xff] %v1310
        %s1323 = sand.u32 %s302, 1
        %s1324 = scalar_lea.sflag [#allocation6], %s1323
        %s1325 = sand.u32 %s302, 1
        %s1326 = smul.addr %s1325, 32
        %s1327 = scalar_lea.vmem [#allocation13], %s1326
        // Predicated region
        $region89: #{tpu_custom_call.1} parent=63 // pred_check
          %p1328 = pneg %p312
        $region90: #{tpu_custom_call.1} parent=63 // pred_check_branch
          %1330 = sbr.rel (%p1328) target = $region92
        $region91: #{tpu_custom_call.1} parent=63 // pred_region
          %s1331 = smul.u32 2, %s36
          %s1333 = ssub.s32 512, 512
          %1334 = vsyncadd %s1324, %s1333
          %s1335 = smul.addr %s1331, 2
          %s1336 = smul.addr %s37, 8
          %s1337 = sadd.s32 %s1335, %s1336
          %s1338 = smul.addr %s1337, 128
          %s1339 = scalar_lea.hbm %s11, %s1338
          %s1340 = sshll.u32 %s1327, 4
          %s1341 = int_to_ptr.vmem [resolvable:$true] %s1340
          %1346 = dma.vmem_to_hbm [thread:$0]  %s1341, 512, %s1339, %s1324, 256, 256, 16
        $region92: #{tpu_custom_call.1} parent=63 // pred_fallthru
          _
      $region64: #{tpu_custom_call.1} parent=5 // pred_fallthru
        _
      %p1347 = scmp.le.s32.totalorder 2, %s27
      // Predicated region
      $region93: #{tpu_custom_call.1} parent=5 // pred_check
        %p1348 = pneg %p1347
      $region94: #{tpu_custom_call.1} parent=5 // pred_check_branch
        %1350 = sbr.rel (%p1348) target = $region96
      $region95: #{tpu_custom_call.1} parent=5 // pred_region
        %s1351 = ssub.s32 %s27, 2
        // Predicated region
        $region97: #{tpu_custom_call.1} parent=95 // pred_check
          %p1352 = pneg %p318
        $region98: #{tpu_custom_call.1} parent=95 // pred_check_branch
          %1354 = sbr.rel (%p1352) target = $region100
        $region99: #{tpu_custom_call.1} parent=95 // pred_region
          %s1355 = sand.u32 %s303, 1
          %s1356 = scalar_lea.sflag [#allocation6], %s1355
          %s1357 = sand.u32 %s303, 1
          %s1358 = smul.addr %s1357, 32
          %s1359 = scalar_lea.vmem [#allocation13], %s1358
          %1360 = dma.done %s1356, 512
        $region100: #{tpu_custom_call.1} parent=95 // pred_fallthru
          _
      $region96: #{tpu_custom_call.1} parent=5 // pred_fallthru
        _
    $region6: #{tpu_custom_call.1} parent=1 // loop_footer
      %s31 = sadd.s32 1, %s27
    $region7: #{tpu_custom_call.1} parent=1 // loop_footer_branch
      %26 = sbr.rel target = $region3
    $region8: #{tpu_custom_call.1} parent=1 // loop_exit
      _
    %1361 = vsyncpa [#allocation5], 1
    %s1362 = scalar_lea.sflag [#allocation5], 1
    %1363 = vsyncpa %s1362, 1
    %1364 = vsyncpa [#allocation8], 1
    %s1365 = scalar_lea.sflag [#allocation8], 1
    %1366 = vsyncpa %s1365, 1
    %1367 = vsyncpa [#allocation11], 1
    %1368 = vsyncpa [#allocation6], 1
    %s1369 = scalar_lea.sflag [#allocation6], 1
    %1370 = vsyncpa %s1369, 1

</llo_original>
